<compile_context>
chip_gen: v6e
topology: v6e:2x2x1
jax: 0.10.0
libtpu: 0.0.40
codegen_flags: <defaults>
</compile_context>

<pallas_src>
import functools

import jax
import jax.numpy as jnp
from jax import lax
from jax.experimental import pallas as pl
from jax.experimental.pallas import tpu as pltpu

NHIDDEN = 300
HPAD = 384          # hidden width padded to a multiple of 128
NOUT_PAD = 128      # logits padded to a full lane width
BN_EPS = 1e-5
NEG_BIG = -1e30     # bias for padded logit columns -> exp() == 0
TM_MAX = 512        # max batch tile
VMEM_BUDGET = 28 * 1024 * 1024   # tile-picking budget (fits v7x / default scoped)
VMEM_LIMIT = 32 * 1024 * 1024    # explicit scoped-VMEM limit (covers v5e default)


def _round_up(x, m):
    return ((x + m - 1) // m) * m


# ----------------------------------------------------------------------------
# Kernel
# ----------------------------------------------------------------------------
def lang_disc_kernel(x_ref, w1_ref, b1_ref, w2_ref, b2_ref, w3_ref, b3_ref,
                     o_ref, acc_ref):
    k = pl.program_id(1)

    @pl.when(k == 0)
    def _():
        # Seed the accumulator with the layer-1 bias (saves an epilogue add).
        acc_ref[...] = jnp.zeros_like(acc_ref) + b1_ref[...]

    # Layer-1 partial matmul over the K (= seq_len*128) axis; bf16 MXU inputs,
    # f32 accumulation. x is cast in-kernel (no wrapper-side bf16 copy of x).
    acc_ref[...] += jnp.dot(x_ref[...].astype(jnp.bfloat16), w1_ref[...],
                            preferred_element_type=jnp.float32)

    @pl.when(k == pl.num_programs(1) - 1)
    def _():
        # Linear1 + ReLU   (bias already in acc; BatchNorm1 folded into w2/b2)
        h = jnp.maximum(acc_ref[...], 0.0)

        # Linear2 + ReLU   (BatchNorm2 folded into w3/b3)
        h = jnp.dot(h.astype(jnp.bfloat16), w2_ref[...],
                    preferred_element_type=jnp.float32) + b2_ref[...]
        h = jnp.maximum(h, 0.0)

        # Linear3 + softmax (padded columns carry -1e30 bias -> exp == 0)
        logits = jnp.dot(h.astype(jnp.bfloat16), w3_ref[...],
                         preferred_element_type=jnp.float32) + b3_ref[...]
        m = jnp.max(logits, axis=-1, keepdims=True)
        e = jnp.exp(logits - m)
        o_ref[...] = e / jnp.sum(e, axis=-1, keepdims=True)


# ----------------------------------------------------------------------------
# Tiling
# ----------------------------------------------------------------------------
def _pick_tiles(batch, din):
    """Pick (tm, tk) so that double-buffered x/w1 tiles + residents + acc fit
    the VMEM budget.  tk is a multiple of 128 dividing din (din = seq_len*128)."""
    tm = min(TM_MAX, _round_up(max(batch, 8), 8))
    resident = (2 * (HPAD * HPAD * 2 + HPAD * NOUT_PAD * 2      # w2, w3 (bf16, x2 buf)
                     + 3 * HPAD * 4 + NOUT_PAD * 4)             # biases (f32, x2 buf)
                + tm * HPAD * 4                                 # acc scratch (f32)
                + 2 * tm * NOUT_PAD * 4)                        # out tile (f32, x2 buf)
    for tk in (8192, 4096, 2048, 1024, 512, 256, 128):
        if din % tk != 0:
            continue
        need = resident + 2 * tm * tk * 4 + 2 * tk * HPAD * 2   # x (f32), w1 (bf16)
        if need <= VMEM_BUDGET:
            return tm, tk
    return tm, 128


# ----------------------------------------------------------------------------
# One-time parameter preparation (hoisted out of the per-call forward)
# ----------------------------------------------------------------------------
def prepare_params(params):
    """Fold eval-mode BN into the following Linear, pad to lane widths, cast
    weights to bf16 (biases stay f32).  Call ONCE and reuse the result."""
    s1 = lax.rsqrt(params["v1"] + BN_EPS) * params["g1"]   # (1, H)
    s2 = lax.rsqrt(params["v2"] + BN_EPS) * params["g2"]

    # BN1(h) @ W2 + b2  ==  h @ (s1.T * W2) + ((be1 - m1*s1) @ W2 + b2)
    w2f = params["w2"] * s1.T
    b2f = (params["be1"] - params["m1"] * s1) @ params["w2"] + params["b2"]
    w3f = params["w3"] * s2.T
    b3f = (params["be2"] - params["m2"] * s2) @ params["w3"] + params["b3"]

    din = params["w1"].shape[0]
    nout = params["w3"].shape[1]
    assert nout <= NOUT_PAD, f"nout={nout} exceeds NOUT_PAD={NOUT_PAD}"

    w1p = jnp.zeros((din, HPAD), jnp.float32).at[:, :NHIDDEN].set(params["w1"])
    b1p = jnp.zeros((1, HPAD), jnp.float32).at[:, :NHIDDEN].set(params["b1"])
    w2p = jnp.zeros((HPAD, HPAD), jnp.float32).at[:NHIDDEN, :NHIDDEN].set(w2f)
    b2p = jnp.zeros((1, HPAD), jnp.float32).at[:, :NHIDDEN].set(b2f)
    w3p = jnp.zeros((HPAD, NOUT_PAD), jnp.float32).at[:NHIDDEN, :nout].set(w3f)
    b3p = jnp.full((1, NOUT_PAD), NEG_BIG, jnp.float32).at[:, :nout].set(b3f)

    folded = dict(
        w1=w1p.astype(jnp.bfloat16), b1=b1p,
        w2=w2p.astype(jnp.bfloat16), b2=b2p,
        w3=w3p.astype(jnp.bfloat16), b3=b3p,
    )
    return folded, nout


# ----------------------------------------------------------------------------
# Forward
# ----------------------------------------------------------------------------
@functools.partial(jax.jit, static_argnames=("nout",))
def language_discriminator_forward(x, folded, *, nout):
    """x: (B, seq_len, 128) float32. Returns (B, nout) softmax probabilities."""
    B = x.shape[0]
    x2d = x.reshape(B, -1)            # x.view(B, -1); stays f32, cast in-kernel
    din = x2d.shape[1]

    tm, tk = _pick_tiles(B, din)
    b_pad = _round_up(B, tm)
    if b_pad != B:
        x2d = jnp.pad(x2d, ((0, b_pad - B), (0, 0)))

    mt = b_pad // tm
    kt = din // tk

    # Megacore-shard the batch axis only when the batch is large enough that
    # per-tile compute outweighs each core re-streaming w1 (no-op on 1-TC chips).
    m_sem = "parallel" if (mt > 1 and b_pad >= 2048) else "arbitrary"

    out = pl.pallas_call(
        lang_disc_kernel,
        out_shape=jax.ShapeDtypeStruct((b_pad, NOUT_PAD), jnp.float32),
        grid_spec=pltpu.PrefetchScalarGridSpec(
            num_scalar_prefetch=0,
            grid=(mt, kt),                                          # K innermost
            in_specs=[
                pl.BlockSpec((tm, tk), lambda m, k: (m, k)),           # x  (M,K tiled)
                pl.BlockSpec((tk, HPAD), lambda m, k: (k, 0)),         # w1 (K tiled)
                pl.BlockSpec((1, HPAD), lambda m, k: (0, 0)),          # b1 (resident)
                pl.BlockSpec((HPAD, HPAD), lambda m, k: (0, 0)),       # w2 (resident)
                pl.BlockSpec((1, HPAD), lambda m, k: (0, 0)),          # b2
                pl.BlockSpec((HPAD, NOUT_PAD), lambda m, k: (0, 0)),   # w3
                pl.BlockSpec((1, NOUT_PAD), lambda m, k: (0, 0)),      # b3
            ],
            out_specs=pl.BlockSpec((tm, NOUT_PAD), lambda m, k: (m, 0)),
            scratch_shapes=[pltpu.VMEM((tm, HPAD), jnp.float32)],
        ),
        compiler_params=pltpu.CompilerParams(
            dimension_semantics=(m_sem, "arbitrary"),
            vmem_limit_bytes=VMEM_LIMIT),
    )(x2d, folded["w1"], folded["b1"], folded["w2"], folded["b2"],
      folded["w3"], folded["b3"])

    return out[:B, :nout]


# ----------------------------------------------------------------------------
# Params / reference
# ----------------------------------------------------------------------------
def _bn_eval(h, gamma, beta, mean, var):
    return (h - mean) * lax.rsqrt(var + BN_EPS) * gamma + beta


def init_params(key, seq_len, nout):
    """PyTorch-shaped params; Linear weights stored as (in, out)."""
    din = seq_len * 128
    k1, k2, k3, kb1, kb2, kb3, kbn = jax.random.split(key, 7)

    def lin(kw, kb, fan_in, fan_out):
        bound = 1.0 / jnp.sqrt(fan_in)
        w = jax.random.uniform(kw, (fan_in, fan_out), jnp.float32, -bound, bound)
        b = jax.random.uniform(kb, (1, fan_out), jnp.float32, -bound, bound)
        return w, b

    w1, b1 = lin(k1, kb1, din, NHIDDEN)
    w2, b2 = lin(k2, kb2, NHIDDEN, NHIDDEN)
    w3, b3 = lin(k3, kb3, NHIDDEN, nout)

    # Mildly non-trivial BN stats so the BN-fold path is genuinely exercised.
    kg1, kb1_, km1, kv1, kg2, kb2_, km2, kv2 = jax.random.split(kbn, 8)
    g1 = 1.0 + 0.1 * jax.random.normal(kg1, (1, NHIDDEN), jnp.float32)
    be1 = 0.1 * jax.random.normal(kb1_, (1, NHIDDEN), jnp.float32)
    m1 = 0.1 * jax.random.normal(km1, (1, NHIDDEN), jnp.float32)
    v1 = 1.0 + 0.1 * jax.random.uniform(kv1, (1, NHIDDEN), jnp.float32)
    g2 = 1.0 + 0.1 * jax.random.normal(kg2, (1, NHIDDEN), jnp.float32)
    be2 = 0.1 * jax.random.normal(kb2_, (1, NHIDDEN), jnp.float32)
    m2 = 0.1 * jax.random.normal(km2, (1, NHIDDEN), jnp.float32)
    v2 = 1.0 + 0.1 * jax.random.uniform(kv2, (1, NHIDDEN), jnp.float32)

    return dict(
        w1=w1, b1=b1, g1=g1, be1=be1, m1=m1, v1=v1,
        w2=w2, b2=b2, g2=g2, be2=be2, m2=m2, v2=v2,
        w3=w3, b3=b3,
    )


def reference_forward(x, params):
    """Pure-JAX f32 reference with the original (unfolded) structure."""
    h = x.reshape(x.shape[0], -1)
    h = jnp.maximum(h @ params["w1"] + params["b1"], 0.0)
    h = _bn_eval(h, params["g1"], params["be1"], params["m1"], params["v1"])
    h = jnp.maximum(h @ params["w2"] + params["b2"], 0.0)
    h = _bn_eval(h, params["g2"], params["be2"], params["m2"], params["v2"])
    logits = h @ params["w3"] + params["b3"]
    return jax.nn.softmax(logits, axis=-1)


if __name__ == "__main__":
    SEQ_LEN = 8
    NOUT = 6
    BATCH = 4

    key = jax.random.PRNGKey(0)
    kx, kp = jax.random.split(key)

    x = jax.random.normal(kx, (BATCH, SEQ_LEN, 128), jnp.float32)
    params = init_params(kp, SEQ_LEN, NOUT)

    # One-time fold/pad/cast (hoisted out of the per-call forward).
    folded, nout = prepare_params(params)
    folded = jax.tree_util.tree_map(jax.block_until_ready, folded)

    out = language_discriminator_forward(x, folded, nout=nout)
    out = jax.block_until_ready(out)

    ref = reference_forward(x, params)
    assert out.shape == (BATCH, NOUT)
    # exact softmax divide -> rows sum to 1 up to f32 rounding
    assert jnp.allclose(jnp.sum(out, axis=-1), 1.0, atol=1e-3)
    # bf16 matmuls -> loose tolerance against the f32 reference
    assert jnp.allclose(out, ref, atol=2e-2, rtol=2e-2)

    print("KERNEL_OK")
</pallas_src>

<mosaic_0001>
module attributes {stable_mosaic.version = 11 : i64} {
  func.func @lang_disc_kernel(%arg0: i32, %arg1: i32, %arg2: memref<8x1024xf32, #tpu.memory_space<vmem>>, %arg3: memref<1024x384xbf16, #tpu.memory_space<vmem>>, %arg4: memref<1x384xf32, #tpu.memory_space<vmem>>, %arg5: memref<384x384xbf16, #tpu.memory_space<vmem>>, %arg6: memref<1x384xf32, #tpu.memory_space<vmem>>, %arg7: memref<384x128xbf16, #tpu.memory_space<vmem>>, %arg8: memref<1x128xf32, #tpu.memory_space<vmem>>, %arg9: memref<8x128xf32, #tpu.memory_space<vmem>>, %arg10: memref<8x384xf32, #tpu.memory_space<vmem>>) attributes {dimension_semantics = [#tpu.dimension_semantics<arbitrary>, #tpu.dimension_semantics<arbitrary>], iteration_bounds = array<i64: 1, 1>, scalar_prefetch = 0 : i64, scratch_operands = 1 : i64, tpu.core_type = #tpu.core_type<tc>, window_params = [{transform_indices = @transform_0, window_bounds = array<i64: 8, 1024>}, {transform_indices = @transform_1, window_bounds = array<i64: 1024, 384>}, {pipeline_mode = #tpu.pipeline_mode<synchronous>, transform_indices = @transform_2, window_bounds = array<i64: 1, 384>}, {pipeline_mode = #tpu.pipeline_mode<synchronous>, transform_indices = @transform_3, window_bounds = array<i64: 384, 384>}, {pipeline_mode = #tpu.pipeline_mode<synchronous>, transform_indices = @transform_4, window_bounds = array<i64: 1, 384>}, {pipeline_mode = #tpu.pipeline_mode<synchronous>, transform_indices = @transform_5, window_bounds = array<i64: 384, 128>}, {pipeline_mode = #tpu.pipeline_mode<synchronous>, transform_indices = @transform_6, window_bounds = array<i64: 1, 128>}, {transform_indices = @transform_7, window_bounds = array<i64: 8, 128>}]} {
    %c0_i32 = arith.constant 0 : i32
    %0 = arith.cmpi eq, %arg1, %c0_i32 : i32
    %1 = arith.extui %0 : i1 to i32
    %c0_i32_0 = arith.constant 0 : i32
    %2 = arith.cmpi ne, %1, %c0_i32_0 : i32
    scf.if %2 {
      %cst_10 = arith.constant 0.000000e+00 : f32
      %13 = vector.broadcast %cst_10 : f32 to vector<8x384xf32>
      %c0_11 = arith.constant 0 : index
      %c0_12 = arith.constant 0 : index
      %14 = vector.load %arg4[%c0_11, %c0_12] : memref<1x384xf32, #tpu.memory_space<vmem>>, vector<1x384xf32>
      %15 = vector.broadcast %14 : vector<1x384xf32> to vector<8x384xf32>
      %16 = arith.addf %13, %15 : vector<8x384xf32>
      %c0_13 = arith.constant 0 : index
      %c0_14 = arith.constant 0 : index
      %17 = vector.load %arg10[%c0_13, %c0_14] : memref<8x384xf32, #tpu.memory_space<vmem>>, vector<8x384xf32>
      tpu.vector_store %arg10[%c0_13, %c0_14], %16 {strides = array<i32>} : memref<8x384xf32, #tpu.memory_space<vmem>>, vector<8x384xf32>,
    } else {
    }
    %c0 = arith.constant 0 : index
    %c0_1 = arith.constant 0 : index
    %3 = vector.load %arg10[%c0, %c0_1] : memref<8x384xf32, #tpu.memory_space<vmem>>, vector<8x384xf32>
    %c0_2 = arith.constant 0 : index
    %c0_3 = arith.constant 0 : index
    %4 = vector.load %arg2[%c0_2, %c0_3] : memref<8x1024xf32, #tpu.memory_space<vmem>>, vector<8x1024xf32>
    %5 = arith.truncf %4 : vector<8x1024xf32> to vector<8x1024xbf16>
    %c0_4 = arith.constant 0 : index
    %c0_5 = arith.constant 0 : index
    %6 = vector.load %arg3[%c0_4, %c0_5] : memref<1024x384xbf16, #tpu.memory_space<vmem>>, vector<1024x384xbf16>
    %cst = arith.constant dense<0.000000e+00> : vector<8x384xf32>
    %7 = tpu.matmul %5, %6, %cst {dimension_numbers = #tpu.dot_dimension_numbers<[1], [0], [0], [1], [0, 0, 1, 1], [], []>} : vector<8x1024xbf16>, vector<1024x384xbf16>, vector<8x384xf32> -> vector<8x384xf32>
    %8 = arith.addf %3, %7 : vector<8x384xf32>
    %c0_6 = arith.constant 0 : index
    %c0_7 = arith.constant 0 : index
    %9 = vector.load %arg10[%c0_6, %c0_7] : memref<8x384xf32, #tpu.memory_space<vmem>>, vector<8x384xf32>
    tpu.vector_store %arg10[%c0_6, %c0_7], %8 {strides = array<i32>} : memref<8x384xf32, #tpu.memory_space<vmem>>, vector<8x384xf32>,
    %c0_i32_8 = arith.constant 0 : i32
    %10 = arith.cmpi eq, %arg1, %c0_i32_8 : i32
    %11 = arith.extui %10 : i1 to i32
    %c0_i32_9 = arith.constant 0 : i32
    %12 = arith.cmpi ne, %11, %c0_i32_9 : i32
    scf.if %12 {
      %c0_10 = arith.constant 0 : index
      %c0_11 = arith.constant 0 : index
      %13 = vector.load %arg10[%c0_10, %c0_11] : memref<8x384xf32, #tpu.memory_space<vmem>>, vector<8x384xf32>
      %cst_12 = arith.constant 0.000000e+00 : f32
      %14 = vector.broadcast %cst_12 : f32 to vector<8x384xf32>
      %15 = arith.maximumf %13, %14 : vector<8x384xf32>
      %16 = arith.truncf %15 : vector<8x384xf32> to vector<8x384xbf16>
      %c0_13 = arith.constant 0 : index
      %c0_14 = arith.constant 0 : index
      %17 = vector.load %arg5[%c0_13, %c0_14] : memref<384x384xbf16, #tpu.memory_space<vmem>>, vector<384x384xbf16>
      %cst_15 = arith.constant dense<0.000000e+00> : vector<8x384xf32>
      %18 = tpu.matmul %16, %17, %cst_15 {dimension_numbers = #tpu.dot_dimension_numbers<[1], [0], [0], [1], [0, 0, 1, 1], [], []>} : vector<8x384xbf16>, vector<384x384xbf16>, vector<8x384xf32> -> vector<8x384xf32>
      %c0_16 = arith.constant 0 : index
      %c0_17 = arith.constant 0 : index
      %19 = vector.load %arg6[%c0_16, %c0_17] : memref<1x384xf32, #tpu.memory_space<vmem>>, vector<1x384xf32>
      %20 = vector.broadcast %19 : vector<1x384xf32> to vector<8x384xf32>
      %21 = arith.addf %18, %20 : vector<8x384xf32>
      %cst_18 = arith.constant 0.000000e+00 : f32
      %22 = vector.broadcast %cst_18 : f32 to vector<8x384xf32>
      %23 = arith.maximumf %21, %22 : vector<8x384xf32>
      %24 = arith.truncf %23 : vector<8x384xf32> to vector<8x384xbf16>
      %c0_19 = arith.constant 0 : index
      %c0_20 = arith.constant 0 : index
      %25 = vector.load %arg7[%c0_19, %c0_20] : memref<384x128xbf16, #tpu.memory_space<vmem>>, vector<384x128xbf16>
      %cst_21 = arith.constant dense<0.000000e+00> : vector<8x128xf32>
      %26 = tpu.matmul %24, %25, %cst_21 {dimension_numbers = #tpu.dot_dimension_numbers<[1], [0], [0], [1], [0, 0, 1, 1], [], []>} : vector<8x384xbf16>, vector<384x128xbf16>, vector<8x128xf32> -> vector<8x128xf32>
      %c0_22 = arith.constant 0 : index
      %c0_23 = arith.constant 0 : index
      %27 = vector.load %arg8[%c0_22, %c0_23] : memref<1x128xf32, #tpu.memory_space<vmem>>, vector<1x128xf32>
      %28 = vector.broadcast %27 : vector<1x128xf32> to vector<8x128xf32>
      %29 = arith.addf %26, %28 : vector<8x128xf32>
      %cst_24 = arith.constant dense<0xFF800000> : vector<8xf32>
      %30 = vector.multi_reduction <maximumf>, %29, %cst_24 [1] : vector<8x128xf32> to vector<8xf32>
      %31 = vector.shape_cast %30 : vector<8xf32> to vector<8x1xf32>
      %32 = vector.broadcast %31 : vector<8x1xf32> to vector<8x128xf32>
      %33 = arith.subf %29, %32 : vector<8x128xf32>
      %34 = math.exp %33 : vector<8x128xf32>
      %cst_25 = arith.constant dense<0.000000e+00> : vector<8xf32>
      %35 = vector.multi_reduction <add>, %34, %cst_25 [1] : vector<8x128xf32> to vector<8xf32>
      %36 = vector.shape_cast %35 : vector<8xf32> to vector<8x1xf32>
      %37 = vector.broadcast %36 : vector<8x1xf32> to vector<8x128xf32>
      %38 = arith.divf %34, %37 : vector<8x128xf32>
      %c0_26 = arith.constant 0 : index
      %c0_27 = arith.constant 0 : index
      %39 = vector.load %arg9[%c0_26, %c0_27] : memref<8x128xf32, #tpu.memory_space<vmem>>, vector<8x128xf32>
      tpu.vector_store %arg9[%c0_26, %c0_27], %38 {strides = array<i32>} : memref<8x128xf32, #tpu.memory_space<vmem>>, vector<8x128xf32>,
    } else {
    }
    return
  }
  func.func @transform_0(%arg0: i32, %arg1: i32) -> (i32, i32) {
    %c0_i32 = arith.constant 0 : i32
    return %arg0, %arg1 : i32, i32
  }
  func.func @transform_1(%arg0: i32, %arg1: i32) -> (i32, i32) {
    %c0_i32 = arith.constant 0 : i32
    %c0_i32_0 = arith.constant 0 : i32
    return %arg1, %c0_i32 : i32, i32
  }
  func.func @transform_2(%arg0: i32, %arg1: i32) -> (i32, i32) {
    %c0_i32 = arith.constant 0 : i32
    %c0_i32_0 = arith.constant 0 : i32
    %c0_i32_1 = arith.constant 0 : i32
    return %c0_i32, %c0_i32_0 : i32, i32
  }
  func.func @transform_3(%arg0: i32, %arg1: i32) -> (i32, i32) {
    %c0_i32 = arith.constant 0 : i32
    %c0_i32_0 = arith.constant 0 : i32
    %c0_i32_1 = arith.constant 0 : i32
    return %c0_i32, %c0_i32_0 : i32, i32
  }
  func.func @transform_4(%arg0: i32, %arg1: i32) -> (i32, i32) {
    %c0_i32 = arith.constant 0 : i32
    %c0_i32_0 = arith.constant 0 : i32
    %c0_i32_1 = arith.constant 0 : i32
    return %c0_i32, %c0_i32_0 : i32, i32
  }
  func.func @transform_5(%arg0: i32, %arg1: i32) -> (i32, i32) {
    %c0_i32 = arith.constant 0 : i32
    %c0_i32_0 = arith.constant 0 : i32
    %c0_i32_1 = arith.constant 0 : i32
    return %c0_i32, %c0_i32_0 : i32, i32
  }
  func.func @transform_6(%arg0: i32, %arg1: i32) -> (i32, i32) {
    %c0_i32 = arith.constant 0 : i32
    %c0_i32_0 = arith.constant 0 : i32
    %c0_i32_1 = arith.constant 0 : i32
    return %c0_i32, %c0_i32_0 : i32, i32
  }
  func.func @transform_7(%arg0: i32, %arg1: i32) -> (i32, i32) {
    %c0_i32 = arith.constant 0 : i32
    %c0_i32_0 = arith.constant 0 : i32
    return %arg0, %c0_i32 : i32, i32
  }
}

</mosaic_0001>

<llo_original>
// kernel: language_discriminator_forward.1
$region0: #{language_discriminator_forward.1}
  #allocation0 [shape = 'u32[]', space=smem, size = 0x4, offset = 0x4, fixed_abs, tag = 'smem constant byte address 0x4 - core index']
  #allocation1 [shape = 'u32[144,128]{1,0:T(1,128)}', space=vmem, size = 0x12000, scoped, tag = 'internal scratch']
  #allocation2 [shape = 'f32[8,384]{1,0:T(8,128)}', space=vmem, size = 0x3000, scoped, tag = 'scratch operand']
  %s0 = inlined_call_operand.vmem [shape: f32[8,1024], index: 0, kind: input, shape index: {}]
  %s1 = inlined_call_operand.hbm [shape: bf16[1024,384], index: 1, kind: input, shape index: {}]
  %s2 = inlined_call_operand.vmem [shape: f32[1,384], index: 2, kind: input, shape index: {}]
  %s3 = inlined_call_operand.hbm [shape: bf16[384,384], index: 3, kind: input, shape index: {}]
  %s4 = inlined_call_operand.vmem [shape: f32[1,384], index: 4, kind: input, shape index: {}]
  %s5 = inlined_call_operand.hbm [shape: bf16[384,128], index: 5, kind: input, shape index: {}]
  %s6 = inlined_call_operand.vmem [shape: f32[1,128], index: 6, kind: input, shape index: {}]
  %s7 = inlined_call_operand.vmem [shape: f32[8,128], index: 7, kind: output, shape index: {}]
  %s8 = sld [smem:[#allocation0]]
  $region58: #{language_discriminator_forward.1} parent=0
    _
  %s10 = ssub.s32 1, %s8
  %s11 = scalar_select 0, %s10, %s8
  $region1: #{language_discriminator_forward.1} parent=0
    #allocation3 [shape = 'u8[786432]{0}', space=vmem, size = 0xc0000, scoped, tag = 'input window, operand 1, single buffered']
    #allocation4 [shape = 's32[1]{0}', space=sflag, size = 0x4, scoped, tag = 'scoped memory for language_discriminator_forward.1']
    #allocation5 [shape = 'u8[294912]{0}', space=vmem, size = 0x48000, scoped, tag = 'input window, operand 3, single buffered']
    #allocation6 [shape = 's32[1]{0}', space=sflag, size = 0x4, scoped, tag = 'scoped memory for language_discriminator_forward.1']
    #allocation7 [shape = 'u8[98304]{0}', space=vmem, size = 0x18000, scoped, tag = 'input window, operand 5, single buffered']
    %12 = vsyncpa [#allocation4], 0
    %13 = vsyncpa [#allocation6], 0
    // Predicated region
    $region2: #{language_discriminator_forward.1} parent=1 // pred_check
      _
    $region3: #{language_discriminator_forward.1} parent=1 // pred_check_branch
      %15 = sbr.rel (0) target = $region5
    $region4: #{language_discriminator_forward.1} parent=1 // pred_region
      _
    $region5: #{language_discriminator_forward.1} parent=1 // pred_fallthru
      _
    // Predicated region
    $region6: #{language_discriminator_forward.1} parent=1 // pred_check
      _
    $region7: #{language_discriminator_forward.1} parent=1 // pred_check_branch
      %17 = sbr.rel (0) target = $region9
    $region8: #{language_discriminator_forward.1} parent=1 // pred_region
      %s19 = ssub.s32 24576, 24576
      %20 = vsyncadd [#allocation4], %s19
      %s21 = sshll.u32 [#allocation3], 4
      %s22 = int_to_ptr.vmem [resolvable:$true] %s21
      %27 = dma.hbm_to_vmem [thread:$0]  %s1, 24576, %s22, [#allocation4], 192, 192, 12
    $region9: #{language_discriminator_forward.1} parent=1 // pred_fallthru
      _
    // Predicated region
    $region10: #{language_discriminator_forward.1} parent=1 // pred_check
      _
    $region11: #{language_discriminator_forward.1} parent=1 // pred_check_branch
      %29 = sbr.rel (0) target = $region13
    $region12: #{language_discriminator_forward.1} parent=1 // pred_region
      _
    $region13: #{language_discriminator_forward.1} parent=1 // pred_fallthru
      _
    // Predicated region
    $region14: #{language_discriminator_forward.1} parent=1 // pred_check
      _
    $region15: #{language_discriminator_forward.1} parent=1 // pred_check_branch
      %31 = sbr.rel (0) target = $region17
    $region16: #{language_discriminator_forward.1} parent=1 // pred_region
      %s33 = ssub.s32 9216, 9216
      %34 = vsyncadd [#allocation6], %s33
      %s35 = sshll.u32 [#allocation5], 4
      %s36 = int_to_ptr.vmem [resolvable:$true] %s35
      %41 = dma.hbm_to_vmem [thread:$0]  %s3, 9216, %s36, [#allocation6], 192, 192, 12
    $region17: #{language_discriminator_forward.1} parent=1 // pred_fallthru
      _
    // Predicated region
    $region18: #{language_discriminator_forward.1} parent=1 // pred_check
      _
    $region19: #{language_discriminator_forward.1} parent=1 // pred_check_branch
      %43 = sbr.rel (0) target = $region21
    $region20: #{language_discriminator_forward.1} parent=1 // pred_region
      _
    $region21: #{language_discriminator_forward.1} parent=1 // pred_fallthru
      _
    // Predicated region
    $region22: #{language_discriminator_forward.1} parent=1 // pred_check
      _
    $region23: #{language_discriminator_forward.1} parent=1 // pred_check_branch
      %45 = sbr.rel (0) target = $region25
    $region24: #{language_discriminator_forward.1} parent=1 // pred_region
      %s47 = ssub.s32 3072, 3072
      %48 = vsyncadd [#allocation6], %s47
      %s49 = sshll.u32 [#allocation7], 4
      %s50 = int_to_ptr.vmem [resolvable:$true] %s49
      %55 = dma.hbm_to_vmem [thread:$0]  %s5, 3072, %s50, [#allocation6], 64, 64, 4
    $region25: #{language_discriminator_forward.1} parent=1 // pred_fallthru
      _
    // Predicated region
    $region26: #{language_discriminator_forward.1} parent=1 // pred_check
      _
    $region27: #{language_discriminator_forward.1} parent=1 // pred_check_branch
      %57 = sbr.rel (0) target = $region29
    $region28: #{language_discriminator_forward.1} parent=1 // pred_region
      _
    $region29: #{language_discriminator_forward.1} parent=1 // pred_fallthru
      _
    // Predicated region
    $region30: #{language_discriminator_forward.1} parent=1 // pred_check
      _
    $region31: #{language_discriminator_forward.1} parent=1 // pred_check_branch
      %59 = sbr.rel (0) target = $region33
    $region32: #{language_discriminator_forward.1} parent=1 // pred_region
      %60 = dma.done [#allocation4], 24576
    $region33: #{language_discriminator_forward.1} parent=1 // pred_fallthru
      _
    // Predicated region
    $region34: #{language_discriminator_forward.1} parent=1 // pred_check
      _
    $region35: #{language_discriminator_forward.1} parent=1 // pred_check_branch
      %62 = sbr.rel (0) target = $region37
    $region36: #{language_discriminator_forward.1} parent=1 // pred_region
      %63 = dma.done [#allocation6], 9216
    $region37: #{language_discriminator_forward.1} parent=1 // pred_fallthru
      _
    // Predicated region
    $region38: #{language_discriminator_forward.1} parent=1 // pred_check
      _
    $region39: #{language_discriminator_forward.1} parent=1 // pred_check_branch
      %65 = sbr.rel (0) target = $region41
    $region40: #{language_discriminator_forward.1} parent=1 // pred_region
      %66 = dma.done [#allocation6], 3072
    $region41: #{language_discriminator_forward.1} parent=1 // pred_fallthru
      _
    %p68 = scmp.eq.s32.totalorder 0, 0
    // Predicated region
    $region42: #{language_discriminator_forward.1} parent=1 // pred_check
      %p69 = pneg %p68
    $region43: #{language_discriminator_forward.1} parent=1 // pred_check_branch
      %71 = sbr.rel (%p69) target = $region45
    $region44: #{language_discriminator_forward.1} parent=1 // pred_region
      %v72 = vld [vmem:[%s2] sm:$0x7]
      %v74 = vlaneseq
      %v75 = vshrl.u32 %v74, 7
      %v76 = vsub.s32 0, %v75
      %v77 = vrot.slane %v72, %v76
      %v78 = vlaneseq
      %v79 = vshrl.u32 %v78, 7
      %v80 = vsub.s32 1, %v79
      %v81 = vrot.slane %v72, %v80
      %v82 = vlaneseq
      %v83 = vshrl.u32 %v82, 7
      %v84 = vsub.s32 2, %v83
      %v85 = vrot.slane %v72, %v84
      %v89 = vadd.f32 %v77, 0.0
      %v90 = vadd.f32 %v81, 0.0
      %v91 = vadd.f32 %v85, 0.0
      %92 = vst [vmem:[#allocation2] sm:$0xff] %v89
      %93 = vst [vmem:[#allocation2 + $0x8] sm:$0xff] %v90
      %94 = vst [vmem:[#allocation2 + $0x10] sm:$0xff] %v91
    $region45: #{language_discriminator_forward.1} parent=1 // pred_fallthru
      _
    %v95 = vld [vmem:[#allocation2] sm:$0xff]
    %v96 = vld [vmem:[#allocation2 + $0x8] sm:$0xff]
    %v97 = vld [vmem:[#allocation2 + $0x10] sm:$0xff]
    %v98 = vld [vmem:[%s0] sm:$0xff]
    %v99 = vld [vmem:[%s0 + $0x8] sm:$0xff]
    %v100 = vld [vmem:[%s0 + $0x10] sm:$0xff]
    %v101 = vld [vmem:[%s0 + $0x18] sm:$0xff]
    %v102 = vld [vmem:[%s0 + $0x20] sm:$0xff]
    %v103 = vld [vmem:[%s0 + $0x28] sm:$0xff]
    %v104 = vld [vmem:[%s0 + $0x30] sm:$0xff]
    %v105 = vld [vmem:[%s0 + $0x38] sm:$0xff]
    %v106 = vpack.c.bf16 %v98, %v98
    %v107 = vpack.c.bf16 %v99, %v99
    %v108 = vpack.c.bf16 %v100, %v100
    %v109 = vpack.c.bf16 %v101, %v101
    %v110 = vpack.c.bf16 %v102, %v102
    %v111 = vpack.c.bf16 %v103, %v103
    %v112 = vpack.c.bf16 %v104, %v104
    %v113 = vpack.c.bf16 %v105, %v105
    %v114 = vld [vmem:[#allocation3] sm:$0xff]
    %v115 = vld [vmem:[#allocation3 + $0x8] sm:$0xf]
    %v116 = vld [vmem:[#allocation3 + $0xc] sm:$0xff]
    %v117 = vld [vmem:[#allocation3 + $0x14] sm:$0xf]
    %v118 = vld [vmem:[#allocation3 + $0x18] sm:$0xff]
    %v119 = vld [vmem:[#allocation3 + $0x20] sm:$0xf]
    %v120 = vld [vmem:[#allocation3 + $0x24] sm:$0xff]
    %v121 = vld [vmem:[#allocation3 + $0x2c] sm:$0xf]
    %v122 = vld [vmem:[#allocation3 + $0x30] sm:$0xff]
    %v123 = vld [vmem:[#allocation3 + $0x38] sm:$0xf]
    %v124 = vld [vmem:[#allocation3 + $0x3c] sm:$0xff]
    %v125 = vld [vmem:[#allocation3 + $0x44] sm:$0xf]
    %v126 = vld [vmem:[#allocation3 + $0x48] sm:$0xff]
    %v127 = vld [vmem:[#allocation3 + $0x50] sm:$0xf]
    %v128 = vld [vmem:[#allocation3 + $0x54] sm:$0xff]
    %v129 = vld [vmem:[#allocation3 + $0x5c] sm:$0xf]
    %v130 = vld [vmem:[#allocation3 + $0x60] sm:$0xff]
    %v131 = vld [vmem:[#allocation3 + $0x68] sm:$0xf]
    %v132 = vld [vmem:[#allocation3 + $0x6c] sm:$0xff]
    %v133 = vld [vmem:[#allocation3 + $0x74] sm:$0xf]
    %v134 = vld [vmem:[#allocation3 + $0x78] sm:$0xff]
    %v135 = vld [vmem:[#allocation3 + $0x80] sm:$0xf]
    %v136 = vld [vmem:[#allocation3 + $0x84] sm:$0xff]
    %v137 = vld [vmem:[#allocation3 + $0x8c] sm:$0xf]
    %v138 = vld [vmem:[#allocation3 + $0x90] sm:$0xff]
    %v139 = vld [vmem:[#allocation3 + $0x98] sm:$0xf]
    %v140 = vld [vmem:[#allocation3 + $0x9c] sm:$0xff]
    %v141 = vld [vmem:[#allocation3 + $0xa4] sm:$0xf]
    %v142 = vld [vmem:[#allocation3 + $0xa8] sm:$0xff]
    %v143 = vld [vmem:[#allocation3 + $0xb0] sm:$0xf]
    %v144 = vld [vmem:[#allocation3 + $0xb4] sm:$0xff]
    %v145 = vld [vmem:[#allocation3 + $0xbc] sm:$0xf]
    %v146 = vld [vmem:[#allocation3 + $0xc0] sm:$0xff]
    %v147 = vld [vmem:[#allocation3 + $0xc8] sm:$0xf]
    %v148 = vld [vmem:[#allocation3 + $0xcc] sm:$0xff]
    %v149 = vld [vmem:[#allocation3 + $0xd4] sm:$0xf]
    %v150 = vld [vmem:[#allocation3 + $0xd8] sm:$0xff]
    %v151 = vld [vmem:[#allocation3 + $0xe0] sm:$0xf]
    %v152 = vld [vmem:[#allocation3 + $0xe4] sm:$0xff]
    %v153 = vld [vmem:[#allocation3 + $0xec] sm:$0xf]
    %v154 = vld [vmem:[#allocation3 + $0xf0] sm:$0xff]
    %v155 = vld [vmem:[#allocation3 + $0xf8] sm:$0xf]
    %v156 = vld [vmem:[#allocation3 + $0xfc] sm:$0xff]
    %v157 = vld [vmem:[#allocation3 + $0x104] sm:$0xf]
    %v158 = vld [vmem:[#allocation3 + $0x108] sm:$0xff]
    %v159 = vld [vmem:[#allocation3 + $0x110] sm:$0xf]
    %v160 = vld [vmem:[#allocation3 + $0x114] sm:$0xff]
    %v161 = vld [vmem:[#allocation3 + $0x11c] sm:$0xf]
    %v162 = vld [vmem:[#allocation3 + $0x120] sm:$0xff]
    %v163 = vld [vmem:[#allocation3 + $0x128] sm:$0xf]
    %v164 = vld [vmem:[#allocation3 + $0x12c] sm:$0xff]
    %v165 = vld [vmem:[#allocation3 + $0x134] sm:$0xf]
    %v166 = vld [vmem:[#allocation3 + $0x138] sm:$0xff]
    %v167 = vld [vmem:[#allocation3 + $0x140] sm:$0xf]
    %v168 = vld [vmem:[#allocation3 + $0x144] sm:$0xff]
    %v169 = vld [vmem:[#allocation3 + $0x14c] sm:$0xf]
    %v170 = vld [vmem:[#allocation3 + $0x150] sm:$0xff]
    %v171 = vld [vmem:[#allocation3 + $0x158] sm:$0xf]
    %v172 = vld [vmem:[#allocation3 + $0x15c] sm:$0xff]
    %v173 = vld [vmem:[#allocation3 + $0x164] sm:$0xf]
    %v174 = vld [vmem:[#allocation3 + $0x168] sm:$0xff]
    %v175 = vld [vmem:[#allocation3 + $0x170] sm:$0xf]
    %v176 = vld [vmem:[#allocation3 + $0x174] sm:$0xff]
    %v177 = vld [vmem:[#allocation3 + $0x17c] sm:$0xf]
    %v178 = vld [vmem:[#allocation3 + $0x180] sm:$0xff]
    %v179 = vld [vmem:[#allocation3 + $0x188] sm:$0xf]
    %v180 = vld [vmem:[#allocation3 + $0x18c] sm:$0xff]
    %v181 = vld [vmem:[#allocation3 + $0x194] sm:$0xf]
    %v182 = vld [vmem:[#allocation3 + $0x198] sm:$0xff]
    %v183 = vld [vmem:[#allocation3 + $0x1a0] sm:$0xf]
    %v184 = vld [vmem:[#allocation3 + $0x1a4] sm:$0xff]
    %v185 = vld [vmem:[#allocation3 + $0x1ac] sm:$0xf]
    %v186 = vld [vmem:[#allocation3 + $0x1b0] sm:$0xff]
    %v187 = vld [vmem:[#allocation3 + $0x1b8] sm:$0xf]
    %v188 = vld [vmem:[#allocation3 + $0x1bc] sm:$0xff]
    %v189 = vld [vmem:[#allocation3 + $0x1c4] sm:$0xf]
    %v190 = vld [vmem:[#allocation3 + $0x1c8] sm:$0xff]
    %v191 = vld [vmem:[#allocation3 + $0x1d0] sm:$0xf]
    %v192 = vld [vmem:[#allocation3 + $0x1d4] sm:$0xff]
    %v193 = vld [vmem:[#allocation3 + $0x1dc] sm:$0xf]
    %v194 = vld [vmem:[#allocation3 + $0x1e0] sm:$0xff]
    %v195 = vld [vmem:[#allocation3 + $0x1e8] sm:$0xf]
    %v196 = vld [vmem:[#allocation3 + $0x1ec] sm:$0xff]
    %v197 = vld [vmem:[#allocation3 + $0x1f4] sm:$0xf]
    %v198 = vld [vmem:[#allocation3 + $0x1f8] sm:$0xff]
    %v199 = vld [vmem:[#allocation3 + $0x200] sm:$0xf]
    %v200 = vld [vmem:[#allocation3 + $0x204] sm:$0xff]
    %v201 = vld [vmem:[#allocation3 + $0x20c] sm:$0xf]
    %v202 = vld [vmem:[#allocation3 + $0x210] sm:$0xff]
    %v203 = vld [vmem:[#allocation3 + $0x218] sm:$0xf]
    %v204 = vld [vmem:[#allocation3 + $0x21c] sm:$0xff]
    %v205 = vld [vmem:[#allocation3 + $0x224] sm:$0xf]
    %v206 = vld [vmem:[#allocation3 + $0x228] sm:$0xff]
    %v207 = vld [vmem:[#allocation3 + $0x230] sm:$0xf]
    %v208 = vld [vmem:[#allocation3 + $0x234] sm:$0xff]
    %v209 = vld [vmem:[#allocation3 + $0x23c] sm:$0xf]
    %v210 = vld [vmem:[#allocation3 + $0x240] sm:$0xff]
    %v211 = vld [vmem:[#allocation3 + $0x248] sm:$0xf]
    %v212 = vld [vmem:[#allocation3 + $0x24c] sm:$0xff]
    %v213 = vld [vmem:[#allocation3 + $0x254] sm:$0xf]
    %v214 = vld [vmem:[#allocation3 + $0x258] sm:$0xff]
    %v215 = vld [vmem:[#allocation3 + $0x260] sm:$0xf]
    %v216 = vld [vmem:[#allocation3 + $0x264] sm:$0xff]
    %v217 = vld [vmem:[#allocation3 + $0x26c] sm:$0xf]
    %v218 = vld [vmem:[#allocation3 + $0x270] sm:$0xff]
    %v219 = vld [vmem:[#allocation3 + $0x278] sm:$0xf]
    %v220 = vld [vmem:[#allocation3 + $0x27c] sm:$0xff]
    %v221 = vld [vmem:[#allocation3 + $0x284] sm:$0xf]
    %v222 = vld [vmem:[#allocation3 + $0x288] sm:$0xff]
    %v223 = vld [vmem:[#allocation3 + $0x290] sm:$0xf]
    %v224 = vld [vmem:[#allocation3 + $0x294] sm:$0xff]
    %v225 = vld [vmem:[#allocation3 + $0x29c] sm:$0xf]
    %v226 = vld [vmem:[#allocation3 + $0x2a0] sm:$0xff]
    %v227 = vld [vmem:[#allocation3 + $0x2a8] sm:$0xf]
    %v228 = vld [vmem:[#allocation3 + $0x2ac] sm:$0xff]
    %v229 = vld [vmem:[#allocation3 + $0x2b4] sm:$0xf]
    %v230 = vld [vmem:[#allocation3 + $0x2b8] sm:$0xff]
    %v231 = vld [vmem:[#allocation3 + $0x2c0] sm:$0xf]
    %v232 = vld [vmem:[#allocation3 + $0x2c4] sm:$0xff]
    %v233 = vld [vmem:[#allocation3 + $0x2cc] sm:$0xf]
    %v234 = vld [vmem:[#allocation3 + $0x2d0] sm:$0xff]
    %v235 = vld [vmem:[#allocation3 + $0x2d8] sm:$0xf]
    %v236 = vld [vmem:[#allocation3 + $0x2dc] sm:$0xff]
    %v237 = vld [vmem:[#allocation3 + $0x2e4] sm:$0xf]
    %v238 = vld [vmem:[#allocation3 + $0x2e8] sm:$0xff]
    %v239 = vld [vmem:[#allocation3 + $0x2f0] sm:$0xf]
    %v240 = vld [vmem:[#allocation3 + $0x2f4] sm:$0xff]
    %v241 = vld [vmem:[#allocation3 + $0x2fc] sm:$0xf]
    %v242 = vld [vmem:[#allocation3 + $0x300] sm:$0xff]
    %v243 = vld [vmem:[#allocation3 + $0x308] sm:$0xf]
    %v244 = vld [vmem:[#allocation3 + $0x30c] sm:$0xff]
    %v245 = vld [vmem:[#allocation3 + $0x314] sm:$0xf]
    %v246 = vld [vmem:[#allocation3 + $0x318] sm:$0xff]
    %v247 = vld [vmem:[#allocation3 + $0x320] sm:$0xf]
    %v248 = vld [vmem:[#allocation3 + $0x324] sm:$0xff]
    %v249 = vld [vmem:[#allocation3 + $0x32c] sm:$0xf]
    %v250 = vld [vmem:[#allocation3 + $0x330] sm:$0xff]
    %v251 = vld [vmem:[#allocation3 + $0x338] sm:$0xf]
    %v252 = vld [vmem:[#allocation3 + $0x33c] sm:$0xff]
    %v253 = vld [vmem:[#allocation3 + $0x344] sm:$0xf]
    %v254 = vld [vmem:[#allocation3 + $0x348] sm:$0xff]
    %v255 = vld [vmem:[#allocation3 + $0x350] sm:$0xf]
    %v256 = vld [vmem:[#allocation3 + $0x354] sm:$0xff]
    %v257 = vld [vmem:[#allocation3 + $0x35c] sm:$0xf]
    %v258 = vld [vmem:[#allocation3 + $0x360] sm:$0xff]
    %v259 = vld [vmem:[#allocation3 + $0x368] sm:$0xf]
    %v260 = vld [vmem:[#allocation3 + $0x36c] sm:$0xff]
    %v261 = vld [vmem:[#allocation3 + $0x374] sm:$0xf]
    %v262 = vld [vmem:[#allocation3 + $0x378] sm:$0xff]
    %v263 = vld [vmem:[#allocation3 + $0x380] sm:$0xf]
    %v264 = vld [vmem:[#allocation3 + $0x384] sm:$0xff]
    %v265 = vld [vmem:[#allocation3 + $0x38c] sm:$0xf]
    %v266 = vld [vmem:[#allocation3 + $0x390] sm:$0xff]
    %v267 = vld [vmem:[#allocation3 + $0x398] sm:$0xf]
    %v268 = vld [vmem:[#allocation3 + $0x39c] sm:$0xff]
    %v269 = vld [vmem:[#allocation3 + $0x3a4] sm:$0xf]
    %v270 = vld [vmem:[#allocation3 + $0x3a8] sm:$0xff]
    %v271 = vld [vmem:[#allocation3 + $0x3b0] sm:$0xf]
    %v272 = vld [vmem:[#allocation3 + $0x3b4] sm:$0xff]
    %v273 = vld [vmem:[#allocation3 + $0x3bc] sm:$0xf]
    %v274 = vld [vmem:[#allocation3 + $0x3c0] sm:$0xff]
    %v275 = vld [vmem:[#allocation3 + $0x3c8] sm:$0xf]
    %v276 = vld [vmem:[#allocation3 + $0x3cc] sm:$0xff]
    %v277 = vld [vmem:[#allocation3 + $0x3d4] sm:$0xf]
    %v278 = vld [vmem:[#allocation3 + $0x3d8] sm:$0xff]
    %v279 = vld [vmem:[#allocation3 + $0x3e0] sm:$0xf]
    %v280 = vld [vmem:[#allocation3 + $0x3e4] sm:$0xff]
    %v281 = vld [vmem:[#allocation3 + $0x3ec] sm:$0xf]
    %v282 = vld [vmem:[#allocation3 + $0x3f0] sm:$0xff]
    %v283 = vld [vmem:[#allocation3 + $0x3f8] sm:$0xf]
    %v284 = vld [vmem:[#allocation3 + $0x3fc] sm:$0xff]
    %v285 = vld [vmem:[#allocation3 + $0x404] sm:$0xf]
    %v286 = vld [vmem:[#allocation3 + $0x408] sm:$0xff]
    %v287 = vld [vmem:[#allocation3 + $0x410] sm:$0xf]
    %v288 = vld [vmem:[#allocation3 + $0x414] sm:$0xff]
    %v289 = vld [vmem:[#allocation3 + $0x41c] sm:$0xf]
    %v290 = vld [vmem:[#allocation3 + $0x420] sm:$0xff]
    %v291 = vld [vmem:[#allocation3 + $0x428] sm:$0xf]
    %v292 = vld [vmem:[#allocation3 + $0x42c] sm:$0xff]
    %v293 = vld [vmem:[#allocation3 + $0x434] sm:$0xf]
    %v294 = vld [vmem:[#allocation3 + $0x438] sm:$0xff]
    %v295 = vld [vmem:[#allocation3 + $0x440] sm:$0xf]
    %v296 = vld [vmem:[#allocation3 + $0x444] sm:$0xff]
    %v297 = vld [vmem:[#allocation3 + $0x44c] sm:$0xf]
    %v298 = vld [vmem:[#allocation3 + $0x450] sm:$0xff]
    %v299 = vld [vmem:[#allocation3 + $0x458] sm:$0xf]
    %v300 = vld [vmem:[#allocation3 + $0x45c] sm:$0xff]
    %v301 = vld [vmem:[#allocation3 + $0x464] sm:$0xf]
    %v302 = vld [vmem:[#allocation3 + $0x468] sm:$0xff]
    %v303 = vld [vmem:[#allocation3 + $0x470] sm:$0xf]
    %v304 = vld [vmem:[#allocation3 + $0x474] sm:$0xff]
    %v305 = vld [vmem:[#allocation3 + $0x47c] sm:$0xf]
    %v306 = vld [vmem:[#allocation3 + $0x480] sm:$0xff]
    %v307 = vld [vmem:[#allocation3 + $0x488] sm:$0xf]
    %v308 = vld [vmem:[#allocation3 + $0x48c] sm:$0xff]
    %v309 = vld [vmem:[#allocation3 + $0x494] sm:$0xf]
    %v310 = vld [vmem:[#allocation3 + $0x498] sm:$0xff]
    %v311 = vld [vmem:[#allocation3 + $0x4a0] sm:$0xf]
    %v312 = vld [vmem:[#allocation3 + $0x4a4] sm:$0xff]
    %v313 = vld [vmem:[#allocation3 + $0x4ac] sm:$0xf]
    %v314 = vld [vmem:[#allocation3 + $0x4b0] sm:$0xff]
    %v315 = vld [vmem:[#allocation3 + $0x4b8] sm:$0xf]
    %v316 = vld [vmem:[#allocation3 + $0x4bc] sm:$0xff]
    %v317 = vld [vmem:[#allocation3 + $0x4c4] sm:$0xf]
    %v318 = vld [vmem:[#allocation3 + $0x4c8] sm:$0xff]
    %v319 = vld [vmem:[#allocation3 + $0x4d0] sm:$0xf]
    %v320 = vld [vmem:[#allocation3 + $0x4d4] sm:$0xff]
    %v321 = vld [vmem:[#allocation3 + $0x4dc] sm:$0xf]
    %v322 = vld [vmem:[#allocation3 + $0x4e0] sm:$0xff]
    %v323 = vld [vmem:[#allocation3 + $0x4e8] sm:$0xf]
    %v324 = vld [vmem:[#allocation3 + $0x4ec] sm:$0xff]
    %v325 = vld [vmem:[#allocation3 + $0x4f4] sm:$0xf]
    %v326 = vld [vmem:[#allocation3 + $0x4f8] sm:$0xff]
    %v327 = vld [vmem:[#allocation3 + $0x500] sm:$0xf]
    %v328 = vld [vmem:[#allocation3 + $0x504] sm:$0xff]
    %v329 = vld [vmem:[#allocation3 + $0x50c] sm:$0xf]
    %v330 = vld [vmem:[#allocation3 + $0x510] sm:$0xff]
    %v331 = vld [vmem:[#allocation3 + $0x518] sm:$0xf]
    %v332 = vld [vmem:[#allocation3 + $0x51c] sm:$0xff]
    %v333 = vld [vmem:[#allocation3 + $0x524] sm:$0xf]
    %v334 = vld [vmem:[#allocation3 + $0x528] sm:$0xff]
    %v335 = vld [vmem:[#allocation3 + $0x530] sm:$0xf]
    %v336 = vld [vmem:[#allocation3 + $0x534] sm:$0xff]
    %v337 = vld [vmem:[#allocation3 + $0x53c] sm:$0xf]
    %v338 = vld [vmem:[#allocation3 + $0x540] sm:$0xff]
    %v339 = vld [vmem:[#allocation3 + $0x548] sm:$0xf]
    %v340 = vld [vmem:[#allocation3 + $0x54c] sm:$0xff]
    %v341 = vld [vmem:[#allocation3 + $0x554] sm:$0xf]
    %v342 = vld [vmem:[#allocation3 + $0x558] sm:$0xff]
    %v343 = vld [vmem:[#allocation3 + $0x560] sm:$0xf]
    %v344 = vld [vmem:[#allocation3 + $0x564] sm:$0xff]
    %v345 = vld [vmem:[#allocation3 + $0x56c] sm:$0xf]
    %v346 = vld [vmem:[#allocation3 + $0x570] sm:$0xff]
    %v347 = vld [vmem:[#allocation3 + $0x578] sm:$0xf]
    %v348 = vld [vmem:[#allocation3 + $0x57c] sm:$0xff]
    %v349 = vld [vmem:[#allocation3 + $0x584] sm:$0xf]
    %v350 = vld [vmem:[#allocation3 + $0x588] sm:$0xff]
    %v351 = vld [vmem:[#allocation3 + $0x590] sm:$0xf]
    %v352 = vld [vmem:[#allocation3 + $0x594] sm:$0xff]
    %v353 = vld [vmem:[#allocation3 + $0x59c] sm:$0xf]
    %v354 = vld [vmem:[#allocation3 + $0x5a0] sm:$0xff]
    %v355 = vld [vmem:[#allocation3 + $0x5a8] sm:$0xf]
    %v356 = vld [vmem:[#allocation3 + $0x5ac] sm:$0xff]
    %v357 = vld [vmem:[#allocation3 + $0x5b4] sm:$0xf]
    %v358 = vld [vmem:[#allocation3 + $0x5b8] sm:$0xff]
    %v359 = vld [vmem:[#allocation3 + $0x5c0] sm:$0xf]
    %v360 = vld [vmem:[#allocation3 + $0x5c4] sm:$0xff]
    %v361 = vld [vmem:[#allocation3 + $0x5cc] sm:$0xf]
    %v362 = vld [vmem:[#allocation3 + $0x5d0] sm:$0xff]
    %v363 = vld [vmem:[#allocation3 + $0x5d8] sm:$0xf]
    %v364 = vld [vmem:[#allocation3 + $0x5dc] sm:$0xff]
    %v365 = vld [vmem:[#allocation3 + $0x5e4] sm:$0xf]
    %v366 = vld [vmem:[#allocation3 + $0x5e8] sm:$0xff]
    %v367 = vld [vmem:[#allocation3 + $0x5f0] sm:$0xf]
    %v368 = vld [vmem:[#allocation3 + $0x5f4] sm:$0xff]
    %v369 = vld [vmem:[#allocation3 + $0x5fc] sm:$0xf]
    %v626 = vunpack.c.l.b16 %v114
    %v627 = vunpack.c.h.b16 %v114
    %v628 = vunpack.c.l.b16 %v115
    %v629 = vunpack.c.l.b16 %v116
    %v630 = vunpack.c.h.b16 %v116
    %v631 = vunpack.c.l.b16 %v117
    %v632 = vunpack.c.l.b16 %v118
    %v633 = vunpack.c.h.b16 %v118
    %v634 = vunpack.c.l.b16 %v119
    %v635 = vunpack.c.l.b16 %v120
    %v636 = vunpack.c.h.b16 %v120
    %v637 = vunpack.c.l.b16 %v121
    %v638 = vunpack.c.l.b16 %v122
    %v639 = vunpack.c.h.b16 %v122
    %v640 = vunpack.c.l.b16 %v123
    %v641 = vunpack.c.l.b16 %v124
    %v642 = vunpack.c.h.b16 %v124
    %v643 = vunpack.c.l.b16 %v125
    %v644 = vunpack.c.l.b16 %v126
    %v645 = vunpack.c.h.b16 %v126
    %v646 = vunpack.c.l.b16 %v127
    %v647 = vunpack.c.l.b16 %v128
    %v648 = vunpack.c.h.b16 %v128
    %v649 = vunpack.c.l.b16 %v129
    %v650 = vunpack.c.l.b16 %v130
    %v651 = vunpack.c.h.b16 %v130
    %v652 = vunpack.c.l.b16 %v131
    %v653 = vunpack.c.l.b16 %v132
    %v654 = vunpack.c.h.b16 %v132
    %v655 = vunpack.c.l.b16 %v133
    %v656 = vunpack.c.l.b16 %v134
    %v657 = vunpack.c.h.b16 %v134
    %v658 = vunpack.c.l.b16 %v135
    %v659 = vunpack.c.l.b16 %v136
    %v660 = vunpack.c.h.b16 %v136
    %v661 = vunpack.c.l.b16 %v137
    %v662 = vunpack.c.l.b16 %v138
    %v663 = vunpack.c.h.b16 %v138
    %v664 = vunpack.c.l.b16 %v139
    %v665 = vunpack.c.l.b16 %v140
    %v666 = vunpack.c.h.b16 %v140
    %v667 = vunpack.c.l.b16 %v141
    %v668 = vunpack.c.l.b16 %v142
    %v669 = vunpack.c.h.b16 %v142
    %v670 = vunpack.c.l.b16 %v143
    %v671 = vunpack.c.l.b16 %v144
    %v672 = vunpack.c.h.b16 %v144
    %v673 = vunpack.c.l.b16 %v145
    %v674 = vunpack.c.l.b16 %v146
    %v675 = vunpack.c.h.b16 %v146
    %v676 = vunpack.c.l.b16 %v147
    %v677 = vunpack.c.l.b16 %v148
    %v678 = vunpack.c.h.b16 %v148
    %v679 = vunpack.c.l.b16 %v149
    %v680 = vunpack.c.l.b16 %v150
    %v681 = vunpack.c.h.b16 %v150
    %v682 = vunpack.c.l.b16 %v151
    %v683 = vunpack.c.l.b16 %v152
    %v684 = vunpack.c.h.b16 %v152
    %v685 = vunpack.c.l.b16 %v153
    %v686 = vunpack.c.l.b16 %v154
    %v687 = vunpack.c.h.b16 %v154
    %v688 = vunpack.c.l.b16 %v155
    %v689 = vunpack.c.l.b16 %v156
    %v690 = vunpack.c.h.b16 %v156
    %v691 = vunpack.c.l.b16 %v157
    %v692 = vunpack.c.l.b16 %v158
    %v693 = vunpack.c.h.b16 %v158
    %v694 = vunpack.c.l.b16 %v159
    %v695 = vunpack.c.l.b16 %v160
    %v696 = vunpack.c.h.b16 %v160
    %v697 = vunpack.c.l.b16 %v161
    %v698 = vunpack.c.l.b16 %v162
    %v699 = vunpack.c.h.b16 %v162
    %v700 = vunpack.c.l.b16 %v163
    %v701 = vunpack.c.l.b16 %v164
    %v702 = vunpack.c.h.b16 %v164
    %v703 = vunpack.c.l.b16 %v165
    %v704 = vunpack.c.l.b16 %v166
    %v705 = vunpack.c.h.b16 %v166
    %v706 = vunpack.c.l.b16 %v167
    %v707 = vunpack.c.l.b16 %v168
    %v708 = vunpack.c.h.b16 %v168
    %v709 = vunpack.c.l.b16 %v169
    %v710 = vunpack.c.l.b16 %v170
    %v711 = vunpack.c.h.b16 %v170
    %v712 = vunpack.c.l.b16 %v171
    %v713 = vunpack.c.l.b16 %v172
    %v714 = vunpack.c.h.b16 %v172
    %v715 = vunpack.c.l.b16 %v173
    %v716 = vunpack.c.l.b16 %v174
    %v717 = vunpack.c.h.b16 %v174
    %v718 = vunpack.c.l.b16 %v175
    %v719 = vunpack.c.l.b16 %v176
    %v720 = vunpack.c.h.b16 %v176
    %v721 = vunpack.c.l.b16 %v177
    %v722 = vunpack.c.l.b16 %v178
    %v723 = vunpack.c.h.b16 %v178
    %v724 = vunpack.c.l.b16 %v179
    %v725 = vunpack.c.l.b16 %v180
    %v726 = vunpack.c.h.b16 %v180
    %v727 = vunpack.c.l.b16 %v181
    %v728 = vunpack.c.l.b16 %v182
    %v729 = vunpack.c.h.b16 %v182
    %v730 = vunpack.c.l.b16 %v183
    %v731 = vunpack.c.l.b16 %v184
    %v732 = vunpack.c.h.b16 %v184
    %v733 = vunpack.c.l.b16 %v185
    %v734 = vunpack.c.l.b16 %v186
    %v735 = vunpack.c.h.b16 %v186
    %v736 = vunpack.c.l.b16 %v187
    %v737 = vunpack.c.l.b16 %v188
    %v738 = vunpack.c.h.b16 %v188
    %v739 = vunpack.c.l.b16 %v189
    %v740 = vunpack.c.l.b16 %v190
    %v741 = vunpack.c.h.b16 %v190
    %v742 = vunpack.c.l.b16 %v191
    %v743 = vunpack.c.l.b16 %v192
    %v744 = vunpack.c.h.b16 %v192
    %v745 = vunpack.c.l.b16 %v193
    %v746 = vunpack.c.l.b16 %v194
    %v747 = vunpack.c.h.b16 %v194
    %v748 = vunpack.c.l.b16 %v195
    %v749 = vunpack.c.l.b16 %v196
    %v750 = vunpack.c.h.b16 %v196
    %v751 = vunpack.c.l.b16 %v197
    %v752 = vunpack.c.l.b16 %v198
    %v753 = vunpack.c.h.b16 %v198
    %v754 = vunpack.c.l.b16 %v199
    %v755 = vunpack.c.l.b16 %v200
    %v756 = vunpack.c.h.b16 %v200
    %v757 = vunpack.c.l.b16 %v201
    %v758 = vunpack.c.l.b16 %v202
    %v759 = vunpack.c.h.b16 %v202
    %v760 = vunpack.c.l.b16 %v203
    %v761 = vunpack.c.l.b16 %v204
    %v762 = vunpack.c.h.b16 %v204
    %v763 = vunpack.c.l.b16 %v205
    %v764 = vunpack.c.l.b16 %v206
    %v765 = vunpack.c.h.b16 %v206
    %v766 = vunpack.c.l.b16 %v207
    %v767 = vunpack.c.l.b16 %v208
    %v768 = vunpack.c.h.b16 %v208
    %v769 = vunpack.c.l.b16 %v209
    %v770 = vunpack.c.l.b16 %v210
    %v771 = vunpack.c.h.b16 %v210
    %v772 = vunpack.c.l.b16 %v211
    %v773 = vunpack.c.l.b16 %v212
    %v774 = vunpack.c.h.b16 %v212
    %v775 = vunpack.c.l.b16 %v213
    %v776 = vunpack.c.l.b16 %v214
    %v777 = vunpack.c.h.b16 %v214
    %v778 = vunpack.c.l.b16 %v215
    %v779 = vunpack.c.l.b16 %v216
    %v780 = vunpack.c.h.b16 %v216
    %v781 = vunpack.c.l.b16 %v217
    %v782 = vunpack.c.l.b16 %v218
    %v783 = vunpack.c.h.b16 %v218
    %v784 = vunpack.c.l.b16 %v219
    %v785 = vunpack.c.l.b16 %v220
    %v786 = vunpack.c.h.b16 %v220
    %v787 = vunpack.c.l.b16 %v221
    %v788 = vunpack.c.l.b16 %v222
    %v789 = vunpack.c.h.b16 %v222
    %v790 = vunpack.c.l.b16 %v223
    %v791 = vunpack.c.l.b16 %v224
    %v792 = vunpack.c.h.b16 %v224
    %v793 = vunpack.c.l.b16 %v225
    %v794 = vunpack.c.l.b16 %v226
    %v795 = vunpack.c.h.b16 %v226
    %v796 = vunpack.c.l.b16 %v227
    %v797 = vunpack.c.l.b16 %v228
    %v798 = vunpack.c.h.b16 %v228
    %v799 = vunpack.c.l.b16 %v229
    %v800 = vunpack.c.l.b16 %v230
    %v801 = vunpack.c.h.b16 %v230
    %v802 = vunpack.c.l.b16 %v231
    %v803 = vunpack.c.l.b16 %v232
    %v804 = vunpack.c.h.b16 %v232
    %v805 = vunpack.c.l.b16 %v233
    %v806 = vunpack.c.l.b16 %v234
    %v807 = vunpack.c.h.b16 %v234
    %v808 = vunpack.c.l.b16 %v235
    %v809 = vunpack.c.l.b16 %v236
    %v810 = vunpack.c.h.b16 %v236
    %v811 = vunpack.c.l.b16 %v237
    %v812 = vunpack.c.l.b16 %v238
    %v813 = vunpack.c.h.b16 %v238
    %v814 = vunpack.c.l.b16 %v239
    %v815 = vunpack.c.l.b16 %v240
    %v816 = vunpack.c.h.b16 %v240
    %v817 = vunpack.c.l.b16 %v241
    %v818 = vunpack.c.l.b16 %v242
    %v819 = vunpack.c.h.b16 %v242
    %v820 = vunpack.c.l.b16 %v243
    %v821 = vunpack.c.l.b16 %v244
    %v822 = vunpack.c.h.b16 %v244
    %v823 = vunpack.c.l.b16 %v245
    %v824 = vunpack.c.l.b16 %v246
    %v825 = vunpack.c.h.b16 %v246
    %v826 = vunpack.c.l.b16 %v247
    %v827 = vunpack.c.l.b16 %v248
    %v828 = vunpack.c.h.b16 %v248
    %v829 = vunpack.c.l.b16 %v249
    %v830 = vunpack.c.l.b16 %v250
    %v831 = vunpack.c.h.b16 %v250
    %v832 = vunpack.c.l.b16 %v251
    %v833 = vunpack.c.l.b16 %v252
    %v834 = vunpack.c.h.b16 %v252
    %v835 = vunpack.c.l.b16 %v253
    %v836 = vunpack.c.l.b16 %v254
    %v837 = vunpack.c.h.b16 %v254
    %v838 = vunpack.c.l.b16 %v255
    %v839 = vunpack.c.l.b16 %v256
    %v840 = vunpack.c.h.b16 %v256
    %v841 = vunpack.c.l.b16 %v257
    %v842 = vunpack.c.l.b16 %v258
    %v843 = vunpack.c.h.b16 %v258
    %v844 = vunpack.c.l.b16 %v259
    %v845 = vunpack.c.l.b16 %v260
    %v846 = vunpack.c.h.b16 %v260
    %v847 = vunpack.c.l.b16 %v261
    %v848 = vunpack.c.l.b16 %v262
    %v849 = vunpack.c.h.b16 %v262
    %v850 = vunpack.c.l.b16 %v263
    %v851 = vunpack.c.l.b16 %v264
    %v852 = vunpack.c.h.b16 %v264
    %v853 = vunpack.c.l.b16 %v265
    %v854 = vunpack.c.l.b16 %v266
    %v855 = vunpack.c.h.b16 %v266
    %v856 = vunpack.c.l.b16 %v267
    %v857 = vunpack.c.l.b16 %v268
    %v858 = vunpack.c.h.b16 %v268
    %v859 = vunpack.c.l.b16 %v269
    %v860 = vunpack.c.l.b16 %v270
    %v861 = vunpack.c.h.b16 %v270
    %v862 = vunpack.c.l.b16 %v271
    %v863 = vunpack.c.l.b16 %v272
    %v864 = vunpack.c.h.b16 %v272
    %v865 = vunpack.c.l.b16 %v273
    %v866 = vunpack.c.l.b16 %v274
    %v867 = vunpack.c.h.b16 %v274
    %v868 = vunpack.c.l.b16 %v275
    %v869 = vunpack.c.l.b16 %v276
    %v870 = vunpack.c.h.b16 %v276
    %v871 = vunpack.c.l.b16 %v277
    %v872 = vunpack.c.l.b16 %v278
    %v873 = vunpack.c.h.b16 %v278
    %v874 = vunpack.c.l.b16 %v279
    %v875 = vunpack.c.l.b16 %v280
    %v876 = vunpack.c.h.b16 %v280
    %v877 = vunpack.c.l.b16 %v281
    %v878 = vunpack.c.l.b16 %v282
    %v879 = vunpack.c.h.b16 %v282
    %v880 = vunpack.c.l.b16 %v283
    %v881 = vunpack.c.l.b16 %v284
    %v882 = vunpack.c.h.b16 %v284
    %v883 = vunpack.c.l.b16 %v285
    %v884 = vunpack.c.l.b16 %v286
    %v885 = vunpack.c.h.b16 %v286
    %v886 = vunpack.c.l.b16 %v287
    %v887 = vunpack.c.l.b16 %v288
    %v888 = vunpack.c.h.b16 %v288
    %v889 = vunpack.c.l.b16 %v289
    %v890 = vunpack.c.l.b16 %v290
    %v891 = vunpack.c.h.b16 %v290
    %v892 = vunpack.c.l.b16 %v291
    %v893 = vunpack.c.l.b16 %v292
    %v894 = vunpack.c.h.b16 %v292
    %v895 = vunpack.c.l.b16 %v293
    %v896 = vunpack.c.l.b16 %v294
    %v897 = vunpack.c.h.b16 %v294
    %v898 = vunpack.c.l.b16 %v295
    %v899 = vunpack.c.l.b16 %v296
    %v900 = vunpack.c.h.b16 %v296
    %v901 = vunpack.c.l.b16 %v297
    %v902 = vunpack.c.l.b16 %v298
    %v903 = vunpack.c.h.b16 %v298
    %v904 = vunpack.c.l.b16 %v299
    %v905 = vunpack.c.l.b16 %v300
    %v906 = vunpack.c.h.b16 %v300
    %v907 = vunpack.c.l.b16 %v301
    %v908 = vunpack.c.l.b16 %v302
    %v909 = vunpack.c.h.b16 %v302
    %v910 = vunpack.c.l.b16 %v303
    %v911 = vunpack.c.l.b16 %v304
    %v912 = vunpack.c.h.b16 %v304
    %v913 = vunpack.c.l.b16 %v305
    %v914 = vunpack.c.l.b16 %v306
    %v915 = vunpack.c.h.b16 %v306
    %v916 = vunpack.c.l.b16 %v307
    %v917 = vunpack.c.l.b16 %v308
    %v918 = vunpack.c.h.b16 %v308
    %v919 = vunpack.c.l.b16 %v309
    %v920 = vunpack.c.l.b16 %v310
    %v921 = vunpack.c.h.b16 %v310
    %v922 = vunpack.c.l.b16 %v311
    %v923 = vunpack.c.l.b16 %v312
    %v924 = vunpack.c.h.b16 %v312
    %v925 = vunpack.c.l.b16 %v313
    %v926 = vunpack.c.l.b16 %v314
    %v927 = vunpack.c.h.b16 %v314
    %v928 = vunpack.c.l.b16 %v315
    %v929 = vunpack.c.l.b16 %v316
    %v930 = vunpack.c.h.b16 %v316
    %v931 = vunpack.c.l.b16 %v317
    %v932 = vunpack.c.l.b16 %v318
    %v933 = vunpack.c.h.b16 %v318
    %v934 = vunpack.c.l.b16 %v319
    %v935 = vunpack.c.l.b16 %v320
    %v936 = vunpack.c.h.b16 %v320
    %v937 = vunpack.c.l.b16 %v321
    %v938 = vunpack.c.l.b16 %v322
    %v939 = vunpack.c.h.b16 %v322
    %v940 = vunpack.c.l.b16 %v323
    %v941 = vunpack.c.l.b16 %v324
    %v942 = vunpack.c.h.b16 %v324
    %v943 = vunpack.c.l.b16 %v325
    %v944 = vunpack.c.l.b16 %v326
    %v945 = vunpack.c.h.b16 %v326
    %v946 = vunpack.c.l.b16 %v327
    %v947 = vunpack.c.l.b16 %v328
    %v948 = vunpack.c.h.b16 %v328
    %v949 = vunpack.c.l.b16 %v329
    %v950 = vunpack.c.l.b16 %v330
    %v951 = vunpack.c.h.b16 %v330
    %v952 = vunpack.c.l.b16 %v331
    %v953 = vunpack.c.l.b16 %v332
    %v954 = vunpack.c.h.b16 %v332
    %v955 = vunpack.c.l.b16 %v333
    %v956 = vunpack.c.l.b16 %v334
    %v957 = vunpack.c.h.b16 %v334
    %v958 = vunpack.c.l.b16 %v335
    %v959 = vunpack.c.l.b16 %v336
    %v960 = vunpack.c.h.b16 %v336
    %v961 = vunpack.c.l.b16 %v337
    %v962 = vunpack.c.l.b16 %v338
    %v963 = vunpack.c.h.b16 %v338
    %v964 = vunpack.c.l.b16 %v339
    %v965 = vunpack.c.l.b16 %v340
    %v966 = vunpack.c.h.b16 %v340
    %v967 = vunpack.c.l.b16 %v341
    %v968 = vunpack.c.l.b16 %v342
    %v969 = vunpack.c.h.b16 %v342
    %v970 = vunpack.c.l.b16 %v343
    %v971 = vunpack.c.l.b16 %v344
    %v972 = vunpack.c.h.b16 %v344
    %v973 = vunpack.c.l.b16 %v345
    %v974 = vunpack.c.l.b16 %v346
    %v975 = vunpack.c.h.b16 %v346
    %v976 = vunpack.c.l.b16 %v347
    %v977 = vunpack.c.l.b16 %v348
    %v978 = vunpack.c.h.b16 %v348
    %v979 = vunpack.c.l.b16 %v349
    %v980 = vunpack.c.l.b16 %v350
    %v981 = vunpack.c.h.b16 %v350
    %v982 = vunpack.c.l.b16 %v351
    %v983 = vunpack.c.l.b16 %v352
    %v984 = vunpack.c.h.b16 %v352
    %v985 = vunpack.c.l.b16 %v353
    %v986 = vunpack.c.l.b16 %v354
    %v987 = vunpack.c.h.b16 %v354
    %v988 = vunpack.c.l.b16 %v355
    %v989 = vunpack.c.l.b16 %v356
    %v990 = vunpack.c.h.b16 %v356
    %v991 = vunpack.c.l.b16 %v357
    %v992 = vunpack.c.l.b16 %v358
    %v993 = vunpack.c.h.b16 %v358
    %v994 = vunpack.c.l.b16 %v359
    %v995 = vunpack.c.l.b16 %v360
    %v996 = vunpack.c.h.b16 %v360
    %v997 = vunpack.c.l.b16 %v361
    %v998 = vunpack.c.l.b16 %v362
    %v999 = vunpack.c.h.b16 %v362
    %v1000 = vunpack.c.l.b16 %v363
    %v1001 = vunpack.c.l.b16 %v364
    %v1002 = vunpack.c.h.b16 %v364
    %v1003 = vunpack.c.l.b16 %v365
    %v1004 = vunpack.c.l.b16 %v366
    %v1005 = vunpack.c.h.b16 %v366
    %v1006 = vunpack.c.l.b16 %v367
    %v1007 = vunpack.c.l.b16 %v368
    %v1008 = vunpack.c.h.b16 %v368
    %v1009 = vunpack.c.l.b16 %v369
    %v1010 = vpack.c.b16 %v629, %v626
    %v1011 = vpack.c.b16 %v630, %v627
    %v1012 = vpack.c.b16 %v631, %v628
    %v1013 = vpack.c.b16 %v635, %v632
    %v1014 = vpack.c.b16 %v636, %v633
    %v1015 = vpack.c.b16 %v637, %v634
    %v1016 = vpack.c.b16 %v641, %v638
    %v1017 = vpack.c.b16 %v642, %v639
    %v1018 = vpack.c.b16 %v643, %v640
    %v1019 = vpack.c.b16 %v647, %v644
    %v1020 = vpack.c.b16 %v648, %v645
    %v1021 = vpack.c.b16 %v649, %v646
    %v1022 = vpack.c.b16 %v653, %v650
    %v1023 = vpack.c.b16 %v654, %v651
    %v1024 = vpack.c.b16 %v655, %v652
    %v1025 = vpack.c.b16 %v659, %v656
    %v1026 = vpack.c.b16 %v660, %v657
    %v1027 = vpack.c.b16 %v661, %v658
    %v1028 = vpack.c.b16 %v665, %v662
    %v1029 = vpack.c.b16 %v666, %v663
    %v1030 = vpack.c.b16 %v667, %v664
    %v1031 = vpack.c.b16 %v671, %v668
    %v1032 = vpack.c.b16 %v672, %v669
    %v1033 = vpack.c.b16 %v673, %v670
    %v1034 = vpack.c.b16 %v677, %v674
    %v1035 = vpack.c.b16 %v678, %v675
    %v1036 = vpack.c.b16 %v679, %v676
    %v1037 = vpack.c.b16 %v683, %v680
    %v1038 = vpack.c.b16 %v684, %v681
    %v1039 = vpack.c.b16 %v685, %v682
    %v1040 = vpack.c.b16 %v689, %v686
    %v1041 = vpack.c.b16 %v690, %v687
    %v1042 = vpack.c.b16 %v691, %v688
    %v1043 = vpack.c.b16 %v695, %v692
    %v1044 = vpack.c.b16 %v696, %v693
    %v1045 = vpack.c.b16 %v697, %v694
    %v1046 = vpack.c.b16 %v701, %v698
    %v1047 = vpack.c.b16 %v702, %v699
    %v1048 = vpack.c.b16 %v703, %v700
    %v1049 = vpack.c.b16 %v707, %v704
    %v1050 = vpack.c.b16 %v708, %v705
    %v1051 = vpack.c.b16 %v709, %v706
    %v1052 = vpack.c.b16 %v713, %v710
    %v1053 = vpack.c.b16 %v714, %v711
    %v1054 = vpack.c.b16 %v715, %v712
    %v1055 = vpack.c.b16 %v719, %v716
    %v1056 = vpack.c.b16 %v720, %v717
    %v1057 = vpack.c.b16 %v721, %v718
    %v1058 = vpack.c.b16 %v725, %v722
    %v1059 = vpack.c.b16 %v726, %v723
    %v1060 = vpack.c.b16 %v727, %v724
    %v1061 = vpack.c.b16 %v731, %v728
    %v1062 = vpack.c.b16 %v732, %v729
    %v1063 = vpack.c.b16 %v733, %v730
    %v1064 = vpack.c.b16 %v737, %v734
    %v1065 = vpack.c.b16 %v738, %v735
    %v1066 = vpack.c.b16 %v739, %v736
    %v1067 = vpack.c.b16 %v743, %v740
    %v1068 = vpack.c.b16 %v744, %v741
    %v1069 = vpack.c.b16 %v745, %v742
    %v1070 = vpack.c.b16 %v749, %v746
    %v1071 = vpack.c.b16 %v750, %v747
    %v1072 = vpack.c.b16 %v751, %v748
    %v1073 = vpack.c.b16 %v755, %v752
    %v1074 = vpack.c.b16 %v756, %v753
    %v1075 = vpack.c.b16 %v757, %v754
    %v1076 = vpack.c.b16 %v761, %v758
    %v1077 = vpack.c.b16 %v762, %v759
    %v1078 = vpack.c.b16 %v763, %v760
    %v1079 = vpack.c.b16 %v767, %v764
    %v1080 = vpack.c.b16 %v768, %v765
    %v1081 = vpack.c.b16 %v769, %v766
    %v1082 = vpack.c.b16 %v773, %v770
    %v1083 = vpack.c.b16 %v774, %v771
    %v1084 = vpack.c.b16 %v775, %v772
    %v1085 = vpack.c.b16 %v779, %v776
    %v1086 = vpack.c.b16 %v780, %v777
    %v1087 = vpack.c.b16 %v781, %v778
    %v1088 = vpack.c.b16 %v785, %v782
    %v1089 = vpack.c.b16 %v786, %v783
    %v1090 = vpack.c.b16 %v787, %v784
    %v1091 = vpack.c.b16 %v791, %v788
    %v1092 = vpack.c.b16 %v792, %v789
    %v1093 = vpack.c.b16 %v793, %v790
    %v1094 = vpack.c.b16 %v797, %v794
    %v1095 = vpack.c.b16 %v798, %v795
    %v1096 = vpack.c.b16 %v799, %v796
    %v1097 = vpack.c.b16 %v803, %v800
    %v1098 = vpack.c.b16 %v804, %v801
    %v1099 = vpack.c.b16 %v805, %v802
    %v1100 = vpack.c.b16 %v809, %v806
    %v1101 = vpack.c.b16 %v810, %v807
    %v1102 = vpack.c.b16 %v811, %v808
    %v1103 = vpack.c.b16 %v815, %v812
    %v1104 = vpack.c.b16 %v816, %v813
    %v1105 = vpack.c.b16 %v817, %v814
    %v1106 = vpack.c.b16 %v821, %v818
    %v1107 = vpack.c.b16 %v822, %v819
    %v1108 = vpack.c.b16 %v823, %v820
    %v1109 = vpack.c.b16 %v827, %v824
    %v1110 = vpack.c.b16 %v828, %v825
    %v1111 = vpack.c.b16 %v829, %v826
    %v1112 = vpack.c.b16 %v833, %v830
    %v1113 = vpack.c.b16 %v834, %v831
    %v1114 = vpack.c.b16 %v835, %v832
    %v1115 = vpack.c.b16 %v839, %v836
    %v1116 = vpack.c.b16 %v840, %v837
    %v1117 = vpack.c.b16 %v841, %v838
    %v1118 = vpack.c.b16 %v845, %v842
    %v1119 = vpack.c.b16 %v846, %v843
    %v1120 = vpack.c.b16 %v847, %v844
    %v1121 = vpack.c.b16 %v851, %v848
    %v1122 = vpack.c.b16 %v852, %v849
    %v1123 = vpack.c.b16 %v853, %v850
    %v1124 = vpack.c.b16 %v857, %v854
    %v1125 = vpack.c.b16 %v858, %v855
    %v1126 = vpack.c.b16 %v859, %v856
    %v1127 = vpack.c.b16 %v863, %v860
    %v1128 = vpack.c.b16 %v864, %v861
    %v1129 = vpack.c.b16 %v865, %v862
    %v1130 = vpack.c.b16 %v869, %v866
    %v1131 = vpack.c.b16 %v870, %v867
    %v1132 = vpack.c.b16 %v871, %v868
    %v1133 = vpack.c.b16 %v875, %v872
    %v1134 = vpack.c.b16 %v876, %v873
    %v1135 = vpack.c.b16 %v877, %v874
    %v1136 = vpack.c.b16 %v881, %v878
    %v1137 = vpack.c.b16 %v882, %v879
    %v1138 = vpack.c.b16 %v883, %v880
    %v1139 = vpack.c.b16 %v887, %v884
    %v1140 = vpack.c.b16 %v888, %v885
    %v1141 = vpack.c.b16 %v889, %v886
    %v1142 = vpack.c.b16 %v893, %v890
    %v1143 = vpack.c.b16 %v894, %v891
    %v1144 = vpack.c.b16 %v895, %v892
    %v1145 = vpack.c.b16 %v899, %v896
    %v1146 = vpack.c.b16 %v900, %v897
    %v1147 = vpack.c.b16 %v901, %v898
    %v1148 = vpack.c.b16 %v905, %v902
    %v1149 = vpack.c.b16 %v906, %v903
    %v1150 = vpack.c.b16 %v907, %v904
    %v1151 = vpack.c.b16 %v911, %v908
    %v1152 = vpack.c.b16 %v912, %v909
    %v1153 = vpack.c.b16 %v913, %v910
    %v1154 = vpack.c.b16 %v917, %v914
    %v1155 = vpack.c.b16 %v918, %v915
    %v1156 = vpack.c.b16 %v919, %v916
    %v1157 = vpack.c.b16 %v923, %v920
    %v1158 = vpack.c.b16 %v924, %v921
    %v1159 = vpack.c.b16 %v925, %v922
    %v1160 = vpack.c.b16 %v929, %v926
    %v1161 = vpack.c.b16 %v930, %v927
    %v1162 = vpack.c.b16 %v931, %v928
    %v1163 = vpack.c.b16 %v935, %v932
    %v1164 = vpack.c.b16 %v936, %v933
    %v1165 = vpack.c.b16 %v937, %v934
    %v1166 = vpack.c.b16 %v941, %v938
    %v1167 = vpack.c.b16 %v942, %v939
    %v1168 = vpack.c.b16 %v943, %v940
    %v1169 = vpack.c.b16 %v947, %v944
    %v1170 = vpack.c.b16 %v948, %v945
    %v1171 = vpack.c.b16 %v949, %v946
    %v1172 = vpack.c.b16 %v953, %v950
    %v1173 = vpack.c.b16 %v954, %v951
    %v1174 = vpack.c.b16 %v955, %v952
    %v1175 = vpack.c.b16 %v959, %v956
    %v1176 = vpack.c.b16 %v960, %v957
    %v1177 = vpack.c.b16 %v961, %v958
    %v1178 = vpack.c.b16 %v965, %v962
    %v1179 = vpack.c.b16 %v966, %v963
    %v1180 = vpack.c.b16 %v967, %v964
    %v1181 = vpack.c.b16 %v971, %v968
    %v1182 = vpack.c.b16 %v972, %v969
    %v1183 = vpack.c.b16 %v973, %v970
    %v1184 = vpack.c.b16 %v977, %v974
    %v1185 = vpack.c.b16 %v978, %v975
    %v1186 = vpack.c.b16 %v979, %v976
    %v1187 = vpack.c.b16 %v983, %v980
    %v1188 = vpack.c.b16 %v984, %v981
    %v1189 = vpack.c.b16 %v985, %v982
    %v1190 = vpack.c.b16 %v989, %v986
    %v1191 = vpack.c.b16 %v990, %v987
    %v1192 = vpack.c.b16 %v991, %v988
    %v1193 = vpack.c.b16 %v995, %v992
    %v1194 = vpack.c.b16 %v996, %v993
    %v1195 = vpack.c.b16 %v997, %v994
    %v1196 = vpack.c.b16 %v1001, %v998
    %v1197 = vpack.c.b16 %v1002, %v999
    %v1198 = vpack.c.b16 %v1003, %v1000
    %v1199 = vpack.c.b16 %v1007, %v1004
    %v1200 = vpack.c.b16 %v1008, %v1005
    %v1201 = vpack.c.b16 %v1009, %v1006
    %1394 = vmatprep.subr.bf16.mxu0 %v1032
    %1395 = vmatpush1.bf16.msra.mxu0 %v1031
    %1396 = vmatprep.subr.bf16.mxu0 %v1029
    %1397 = vmatpush1.bf16.msra.mxu0 %v1028
    %1398 = vmatprep.subr.bf16.mxu0 %v1026
    %1399 = vmatpush1.bf16.msra.mxu0 %v1025
    %1400 = vmatprep.subr.bf16.mxu0 %v1023
    %1401 = vmatpush1.bf16.msra.mxu0 %v1022
    %1402 = vmatprep.subr.bf16.mxu0 %v1020
    %1403 = vmatpush1.bf16.msra.mxu0 %v1019
    %1404 = vmatprep.subr.bf16.mxu0 %v1017
    %1405 = vmatpush1.bf16.msra.mxu0 %v1016
    %1406 = vmatprep.subr.bf16.mxu0 %v1014
    %1407 = vmatpush1.bf16.msra.mxu0 %v1013
    %1408 = vmatprep.subr.bf16.mxu0 %v1011
    %1409 = vmatpush1.bf16.msra.mxu0 %v1010
    %1410 = vmatprep.subr.bf16.mxu0 %v1056
    %1411 = vmatpush2.bf16.msra.mxu0 %v1055
    %1412 = vmatprep.subr.bf16.mxu0 %v1053
    %1413 = vmatpush2.bf16.msra.mxu0 %v1052
    %1414 = vmatprep.subr.bf16.mxu0 %v1050
    %1415 = vmatpush2.bf16.msra.mxu0 %v1049
    %1416 = vmatprep.subr.bf16.mxu0 %v1047
    %1417 = vmatpush2.bf16.msra.mxu0 %v1046
    %1418 = vmatprep.subr.bf16.mxu0 %v1044
    %1419 = vmatpush2.bf16.msra.mxu0 %v1043
    %1420 = vmatprep.subr.bf16.mxu0 %v1041
    %1421 = vmatpush2.bf16.msra.mxu0 %v1040
    %1422 = vmatprep.subr.bf16.mxu0 %v1038
    %1423 = vmatpush2.bf16.msra.mxu0 %v1037
    %1424 = vmatprep.subr.bf16.mxu0 %v1035
    %1425 = vmatpush2.bf16.msra.mxu0 %v1034
    %1426 = vmatprep.mubr.bf16.mxu0 %v107
    %1427 = vmatmul.mubr.bf16.gmra.mxu0 %v106
    %v1428 = vpop.f32.mrf.mxu0
    %v1429 = vadd.f32 0.0, %v1428
    %v1430 = vpop.f32.mrf.mxu0
    %v1431 = vadd.f32 0.0, %v1430
    %v1432 = vpop.f32.mrf.mxu0
    %v1433 = vpop.f32.mrf.mxu0
    %1434 = vdwg.mxu0
    %1435 = vmatprep.subr.bf16.mxu0 %v1080
    %1436 = vmatpush1.bf16.msra.mxu0 %v1079
    %1437 = vmatprep.subr.bf16.mxu0 %v1077
    %1438 = vmatpush1.bf16.msra.mxu0 %v1076
    %1439 = vmatprep.subr.bf16.mxu0 %v1074
    %1440 = vmatpush1.bf16.msra.mxu0 %v1073
    %1441 = vmatprep.subr.bf16.mxu0 %v1071
    %1442 = vmatpush1.bf16.msra.mxu0 %v1070
    %1443 = vmatprep.subr.bf16.mxu0 %v1068
    %1444 = vmatpush1.bf16.msra.mxu0 %v1067
    %1445 = vmatprep.subr.bf16.mxu0 %v1065
    %1446 = vmatpush1.bf16.msra.mxu0 %v1064
    %1447 = vmatprep.subr.bf16.mxu0 %v1062
    %1448 = vmatpush1.bf16.msra.mxu0 %v1061
    %1449 = vmatprep.subr.bf16.mxu0 %v1059
    %1450 = vmatpush1.bf16.msra.mxu0 %v1058
    %1451 = vmatprep.subr.bf16.mxu0 %v1104
    %1452 = vmatpush2.bf16.msra.mxu0 %v1103
    %1453 = vmatprep.subr.bf16.mxu0 %v1101
    %1454 = vmatpush2.bf16.msra.mxu0 %v1100
    %1455 = vmatprep.subr.bf16.mxu0 %v1098
    %1456 = vmatpush2.bf16.msra.mxu0 %v1097
    %1457 = vmatprep.subr.bf16.mxu0 %v1095
    %1458 = vmatpush2.bf16.msra.mxu0 %v1094
    %1459 = vmatprep.subr.bf16.mxu0 %v1092
    %1460 = vmatpush2.bf16.msra.mxu0 %v1091
    %1461 = vmatprep.subr.bf16.mxu0 %v1089
    %1462 = vmatpush2.bf16.msra.mxu0 %v1088
    %1463 = vmatprep.subr.bf16.mxu0 %v1086
    %1464 = vmatpush2.bf16.msra.mxu0 %v1085
    %1465 = vmatprep.subr.bf16.mxu0 %v1083
    %1466 = vmatpush2.bf16.msra.mxu0 %v1082
    %1467 = vmatprep.mubr.bf16.mxu0 %v109
    %1468 = vmatmul.mubr.bf16.gmra.mxu0 %v108
    %v1469 = vpop.f32.mrf.mxu0
    %v1470 = vadd.f32 %v1429, %v1469
    %v1471 = vpop.f32.mrf.mxu0
    %v1472 = vadd.f32 %v1431, %v1471
    %v1473 = vpop.f32.mrf.mxu0
    %v1474 = vpop.f32.mrf.mxu0
    %1475 = vdwg.mxu0
    %1476 = vmatprep.subr.bf16.mxu0 %v1128
    %1477 = vmatpush1.bf16.msra.mxu0 %v1127
    %1478 = vmatprep.subr.bf16.mxu0 %v1125
    %1479 = vmatpush1.bf16.msra.mxu0 %v1124
    %1480 = vmatprep.subr.bf16.mxu0 %v1122
    %1481 = vmatpush1.bf16.msra.mxu0 %v1121
    %1482 = vmatprep.subr.bf16.mxu0 %v1119
    %1483 = vmatpush1.bf16.msra.mxu0 %v1118
    %1484 = vmatprep.subr.bf16.mxu0 %v1116
    %1485 = vmatpush1.bf16.msra.mxu0 %v1115
    %1486 = vmatprep.subr.bf16.mxu0 %v1113
    %1487 = vmatpush1.bf16.msra.mxu0 %v1112
    %1488 = vmatprep.subr.bf16.mxu0 %v1110
    %1489 = vmatpush1.bf16.msra.mxu0 %v1109
    %1490 = vmatprep.subr.bf16.mxu0 %v1107
    %1491 = vmatpush1.bf16.msra.mxu0 %v1106
    %1492 = vmatprep.subr.bf16.mxu0 %v1152
    %1493 = vmatpush2.bf16.msra.mxu0 %v1151
    %1494 = vmatprep.subr.bf16.mxu0 %v1149
    %1495 = vmatpush2.bf16.msra.mxu0 %v1148
    %1496 = vmatprep.subr.bf16.mxu0 %v1146
    %1497 = vmatpush2.bf16.msra.mxu0 %v1145
    %1498 = vmatprep.subr.bf16.mxu0 %v1143
    %1499 = vmatpush2.bf16.msra.mxu0 %v1142
    %1500 = vmatprep.subr.bf16.mxu0 %v1140
    %1501 = vmatpush2.bf16.msra.mxu0 %v1139
    %1502 = vmatprep.subr.bf16.mxu0 %v1137
    %1503 = vmatpush2.bf16.msra.mxu0 %v1136
    %1504 = vmatprep.subr.bf16.mxu0 %v1134
    %1505 = vmatpush2.bf16.msra.mxu0 %v1133
    %1506 = vmatprep.subr.bf16.mxu0 %v1131
    %1507 = vmatpush2.bf16.msra.mxu0 %v1130
    %1508 = vmatprep.mubr.bf16.mxu0 %v111
    %1509 = vmatmul.mubr.bf16.gmra.mxu0 %v110
    %v1510 = vpop.f32.mrf.mxu0
    %v1511 = vadd.f32 %v1470, %v1510
    %v1512 = vpop.f32.mrf.mxu0
    %v1513 = vadd.f32 %v1472, %v1512
    %v1514 = vpop.f32.mrf.mxu0
    %v1515 = vpop.f32.mrf.mxu0
    %1516 = vdwg.mxu0
    %1517 = vmatprep.subr.bf16.mxu0 %v1176
    %1518 = vmatpush1.bf16.msra.mxu0 %v1175
    %1519 = vmatprep.subr.bf16.mxu0 %v1173
    %1520 = vmatpush1.bf16.msra.mxu0 %v1172
    %1521 = vmatprep.subr.bf16.mxu0 %v1170
    %1522 = vmatpush1.bf16.msra.mxu0 %v1169
    %1523 = vmatprep.subr.bf16.mxu0 %v1167
    %1524 = vmatpush1.bf16.msra.mxu0 %v1166
    %1525 = vmatprep.subr.bf16.mxu0 %v1164
    %1526 = vmatpush1.bf16.msra.mxu0 %v1163
    %1527 = vmatprep.subr.bf16.mxu0 %v1161
    %1528 = vmatpush1.bf16.msra.mxu0 %v1160
    %1529 = vmatprep.subr.bf16.mxu0 %v1158
    %1530 = vmatpush1.bf16.msra.mxu0 %v1157
    %1531 = vmatprep.subr.bf16.mxu0 %v1155
    %1532 = vmatpush1.bf16.msra.mxu0 %v1154
    %1533 = vmatprep.subr.bf16.mxu0 %v1200
    %1534 = vmatpush2.bf16.msra.mxu0 %v1199
    %1535 = vmatprep.subr.bf16.mxu0 %v1197
    %1536 = vmatpush2.bf16.msra.mxu0 %v1196
    %1537 = vmatprep.subr.bf16.mxu0 %v1194
    %1538 = vmatpush2.bf16.msra.mxu0 %v1193
    %1539 = vmatprep.subr.bf16.mxu0 %v1191
    %1540 = vmatpush2.bf16.msra.mxu0 %v1190
    %1541 = vmatprep.subr.bf16.mxu0 %v1188
    %1542 = vmatpush2.bf16.msra.mxu0 %v1187
    %1543 = vmatprep.subr.bf16.mxu0 %v1185
    %1544 = vmatpush2.bf16.msra.mxu0 %v1184
    %1545 = vmatprep.subr.bf16.mxu0 %v1182
    %1546 = vmatpush2.bf16.msra.mxu0 %v1181
    %1547 = vmatprep.subr.bf16.mxu0 %v1179
    %1548 = vmatpush2.bf16.msra.mxu0 %v1178
    %1549 = vmatprep.mubr.bf16.mxu0 %v113
    %1550 = vmatmul.mubr.bf16.gmra.mxu0 %v112
    %v1551 = vpop.f32.mrf.mxu0
    %v1552 = vadd.f32 %v1511, %v1551
    %v1553 = vpop.f32.mrf.mxu0
    %v1554 = vadd.f32 %v1513, %v1553
    %v1555 = vpop.f32.mrf.mxu0
    %v1556 = vpop.f32.mrf.mxu0
    %1557 = vdwg.mxu0
    %1558 = vmatprep.subr.bf16.mxu0 0
    %1559 = vmatpush1.bf16.msra.mxu0 %v1033
    %1560 = vmatprep.subr.bf16.mxu0 0
    %1561 = vmatpush1.bf16.msra.mxu0 %v1030
    %1562 = vmatprep.subr.bf16.mxu0 0
    %1563 = vmatpush1.bf16.msra.mxu0 %v1027
    %1564 = vmatprep.subr.bf16.mxu0 0
    %1565 = vmatpush1.bf16.msra.mxu0 %v1024
    %1566 = vmatprep.subr.bf16.mxu0 0
    %1567 = vmatpush1.bf16.msra.mxu0 %v1021
    %1568 = vmatprep.subr.bf16.mxu0 0
    %1569 = vmatpush1.bf16.msra.mxu0 %v1018
    %1570 = vmatprep.subr.bf16.mxu0 0
    %1571 = vmatpush1.bf16.msra.mxu0 %v1015
    %1572 = vmatprep.subr.bf16.mxu0 0
    %1573 = vmatpush1.bf16.msra.mxu0 %v1012
    %1574 = vmatprep.subr.bf16.mxu0 0
    %1575 = vmatpush2.bf16.msra.mxu0 %v1057
    %1576 = vmatprep.subr.bf16.mxu0 0
    %1577 = vmatpush2.bf16.msra.mxu0 %v1054
    %1578 = vmatprep.subr.bf16.mxu0 0
    %1579 = vmatpush2.bf16.msra.mxu0 %v1051
    %1580 = vmatprep.subr.bf16.mxu0 0
    %1581 = vmatpush2.bf16.msra.mxu0 %v1048
    %1582 = vmatprep.subr.bf16.mxu0 0
    %1583 = vmatpush2.bf16.msra.mxu0 %v1045
    %1584 = vmatprep.subr.bf16.mxu0 0
    %1585 = vmatpush2.bf16.msra.mxu0 %v1042
    %1586 = vmatprep.subr.bf16.mxu0 0
    %1587 = vmatpush2.bf16.msra.mxu0 %v1039
    %1588 = vmatprep.subr.bf16.mxu0 0
    %1589 = vmatpush2.bf16.msra.mxu0 %v1036
    %1590 = vmatprep.mubr.bf16.mxu0 %v107
    %1591 = vmatmul.mubr.bf16.gmra.mxu0 %v106
    %v1592 = vpop.f32.mrf.mxu0
    %v1593 = vadd.f32 0.0, %v1592
    %v1594 = vpop.f32.mrf.mxu0
    %v1595 = vpop.f32.mrf.mxu0
    %v1596 = vpop.f32.mrf.mxu0
    %1597 = vdwg.mxu0
    %1598 = vmatprep.subr.bf16.mxu0 0
    %1599 = vmatpush1.bf16.msra.mxu0 %v1081
    %1600 = vmatprep.subr.bf16.mxu0 0
    %1601 = vmatpush1.bf16.msra.mxu0 %v1078
    %1602 = vmatprep.subr.bf16.mxu0 0
    %1603 = vmatpush1.bf16.msra.mxu0 %v1075
    %1604 = vmatprep.subr.bf16.mxu0 0
    %1605 = vmatpush1.bf16.msra.mxu0 %v1072
    %1606 = vmatprep.subr.bf16.mxu0 0
    %1607 = vmatpush1.bf16.msra.mxu0 %v1069
    %1608 = vmatprep.subr.bf16.mxu0 0
    %1609 = vmatpush1.bf16.msra.mxu0 %v1066
    %1610 = vmatprep.subr.bf16.mxu0 0
    %1611 = vmatpush1.bf16.msra.mxu0 %v1063
    %1612 = vmatprep.subr.bf16.mxu0 0
    %1613 = vmatpush1.bf16.msra.mxu0 %v1060
    %1614 = vmatprep.subr.bf16.mxu0 0
    %1615 = vmatpush2.bf16.msra.mxu0 %v1105
    %1616 = vmatprep.subr.bf16.mxu0 0
    %1617 = vmatpush2.bf16.msra.mxu0 %v1102
    %1618 = vmatprep.subr.bf16.mxu0 0
    %1619 = vmatpush2.bf16.msra.mxu0 %v1099
    %1620 = vmatprep.subr.bf16.mxu0 0
    %1621 = vmatpush2.bf16.msra.mxu0 %v1096
    %1622 = vmatprep.subr.bf16.mxu0 0
    %1623 = vmatpush2.bf16.msra.mxu0 %v1093
    %1624 = vmatprep.subr.bf16.mxu0 0
    %1625 = vmatpush2.bf16.msra.mxu0 %v1090
    %1626 = vmatprep.subr.bf16.mxu0 0
    %1627 = vmatpush2.bf16.msra.mxu0 %v1087
    %1628 = vmatprep.subr.bf16.mxu0 0
    %1629 = vmatpush2.bf16.msra.mxu0 %v1084
    %1630 = vmatprep.mubr.bf16.mxu0 %v109
    %1631 = vmatmul.mubr.bf16.gmra.mxu0 %v108
    %v1632 = vpop.f32.mrf.mxu0
    %v1633 = vadd.f32 %v1593, %v1632
    %v1634 = vpop.f32.mrf.mxu0
    %v1635 = vpop.f32.mrf.mxu0
    %v1636 = vpop.f32.mrf.mxu0
    %1637 = vdwg.mxu0
    %1638 = vmatprep.subr.bf16.mxu0 0
    %1639 = vmatpush1.bf16.msra.mxu0 %v1129
    %1640 = vmatprep.subr.bf16.mxu0 0
    %1641 = vmatpush1.bf16.msra.mxu0 %v1126
    %1642 = vmatprep.subr.bf16.mxu0 0
    %1643 = vmatpush1.bf16.msra.mxu0 %v1123
    %1644 = vmatprep.subr.bf16.mxu0 0
    %1645 = vmatpush1.bf16.msra.mxu0 %v1120
    %1646 = vmatprep.subr.bf16.mxu0 0
    %1647 = vmatpush1.bf16.msra.mxu0 %v1117
    %1648 = vmatprep.subr.bf16.mxu0 0
    %1649 = vmatpush1.bf16.msra.mxu0 %v1114
    %1650 = vmatprep.subr.bf16.mxu0 0
    %1651 = vmatpush1.bf16.msra.mxu0 %v1111
    %1652 = vmatprep.subr.bf16.mxu0 0
    %1653 = vmatpush1.bf16.msra.mxu0 %v1108
    %1654 = vmatprep.subr.bf16.mxu0 0
    %1655 = vmatpush2.bf16.msra.mxu0 %v1153
    %1656 = vmatprep.subr.bf16.mxu0 0
    %1657 = vmatpush2.bf16.msra.mxu0 %v1150
    %1658 = vmatprep.subr.bf16.mxu0 0
    %1659 = vmatpush2.bf16.msra.mxu0 %v1147
    %1660 = vmatprep.subr.bf16.mxu0 0
    %1661 = vmatpush2.bf16.msra.mxu0 %v1144
    %1662 = vmatprep.subr.bf16.mxu0 0
    %1663 = vmatpush2.bf16.msra.mxu0 %v1141
    %1664 = vmatprep.subr.bf16.mxu0 0
    %1665 = vmatpush2.bf16.msra.mxu0 %v1138
    %1666 = vmatprep.subr.bf16.mxu0 0
    %1667 = vmatpush2.bf16.msra.mxu0 %v1135
    %1668 = vmatprep.subr.bf16.mxu0 0
    %1669 = vmatpush2.bf16.msra.mxu0 %v1132
    %1670 = vmatprep.mubr.bf16.mxu0 %v111
    %1671 = vmatmul.mubr.bf16.gmra.mxu0 %v110
    %v1672 = vpop.f32.mrf.mxu0
    %v1673 = vadd.f32 %v1633, %v1672
    %v1674 = vpop.f32.mrf.mxu0
    %v1675 = vpop.f32.mrf.mxu0
    %v1676 = vpop.f32.mrf.mxu0
    %1677 = vdwg.mxu0
    %1678 = vmatprep.subr.bf16.mxu0 0
    %1679 = vmatpush1.bf16.msra.mxu0 %v1177
    %1680 = vmatprep.subr.bf16.mxu0 0
    %1681 = vmatpush1.bf16.msra.mxu0 %v1174
    %1682 = vmatprep.subr.bf16.mxu0 0
    %1683 = vmatpush1.bf16.msra.mxu0 %v1171
    %1684 = vmatprep.subr.bf16.mxu0 0
    %1685 = vmatpush1.bf16.msra.mxu0 %v1168
    %1686 = vmatprep.subr.bf16.mxu0 0
    %1687 = vmatpush1.bf16.msra.mxu0 %v1165
    %1688 = vmatprep.subr.bf16.mxu0 0
    %1689 = vmatpush1.bf16.msra.mxu0 %v1162
    %1690 = vmatprep.subr.bf16.mxu0 0
    %1691 = vmatpush1.bf16.msra.mxu0 %v1159
    %1692 = vmatprep.subr.bf16.mxu0 0
    %1693 = vmatpush1.bf16.msra.mxu0 %v1156
    %1694 = vmatprep.subr.bf16.mxu0 0
    %1695 = vmatpush2.bf16.msra.mxu0 %v1201
    %1696 = vmatprep.subr.bf16.mxu0 0
    %1697 = vmatpush2.bf16.msra.mxu0 %v1198
    %1698 = vmatprep.subr.bf16.mxu0 0
    %1699 = vmatpush2.bf16.msra.mxu0 %v1195
    %1700 = vmatprep.subr.bf16.mxu0 0
    %1701 = vmatpush2.bf16.msra.mxu0 %v1192
    %1702 = vmatprep.subr.bf16.mxu0 0
    %1703 = vmatpush2.bf16.msra.mxu0 %v1189
    %1704 = vmatprep.subr.bf16.mxu0 0
    %1705 = vmatpush2.bf16.msra.mxu0 %v1186
    %1706 = vmatprep.subr.bf16.mxu0 0
    %1707 = vmatpush2.bf16.msra.mxu0 %v1183
    %1708 = vmatprep.subr.bf16.mxu0 0
    %1709 = vmatpush2.bf16.msra.mxu0 %v1180
    %1710 = vmatprep.mubr.bf16.mxu0 %v113
    %1711 = vmatmul.mubr.bf16.gmra.mxu0 %v112
    %v1712 = vpop.f32.mrf.mxu0
    %v1713 = vadd.f32 %v1673, %v1712
    %v1714 = vpop.f32.mrf.mxu0
    %v1715 = vpop.f32.mrf.mxu0
    %v1716 = vpop.f32.mrf.mxu0
    %1717 = vdwg.mxu0
    %v1718 = vadd.f32 %v95, %v1552
    %v1719 = vadd.f32 %v96, %v1554
    %v1720 = vadd.f32 %v97, %v1713
    %1721 = vst [vmem:[#allocation2] sm:$0xff] %v1718
    %1722 = vst [vmem:[#allocation2 + $0x8] sm:$0xff] %v1719
    %1723 = vst [vmem:[#allocation2 + $0x10] sm:$0xff] %v1720
    // Predicated region
    $region46: #{language_discriminator_forward.1} parent=1 // pred_check
      %p1724 = pneg %p68
    $region47: #{language_discriminator_forward.1} parent=1 // pred_check_branch
      %1726 = sbr.rel (%p1724) target = $region49
    $region48: #{language_discriminator_forward.1} parent=1 // pred_region
      %v1727 = vld [vmem:[#allocation2] sm:$0xff]
      %v1728 = vld [vmem:[#allocation2 + $0x8] sm:$0xff]
      %v1729 = vld [vmem:[#allocation2 + $0x10] sm:$0xff]
      %v1730 = vmax.f32 %v1727, 0.0
      %v1731 = vmax.f32 %v1728, 0.0
      %v1732 = vmax.f32 %v1729, 0.0
      %v1733 = vpack.c.bf16 %v1730, %v1730
      %v1734 = vpack.c.bf16 %v1731, %v1731
      %v1735 = vpack.c.bf16 %v1732, %v1732
      %v1736 = vld [vmem:[#allocation5] sm:$0xff]
      %v1737 = vld [vmem:[#allocation5 + $0x8] sm:$0xf]
      %v1738 = vld [vmem:[#allocation5 + $0xc] sm:$0xff]
      %v1739 = vld [vmem:[#allocation5 + $0x14] sm:$0xf]
      %v1740 = vld [vmem:[#allocation5 + $0x18] sm:$0xff]
      %v1741 = vld [vmem:[#allocation5 + $0x20] sm:$0xf]
      %v1742 = vld [vmem:[#allocation5 + $0x24] sm:$0xff]
      %v1743 = vld [vmem:[#allocation5 + $0x2c] sm:$0xf]
      %v1744 = vld [vmem:[#allocation5 + $0x30] sm:$0xff]
      %v1745 = vld [vmem:[#allocation5 + $0x38] sm:$0xf]
      %v1746 = vld [vmem:[#allocation5 + $0x3c] sm:$0xff]
      %v1747 = vld [vmem:[#allocation5 + $0x44] sm:$0xf]
      %v1748 = vld [vmem:[#allocation5 + $0x48] sm:$0xff]
      %v1749 = vld [vmem:[#allocation5 + $0x50] sm:$0xf]
      %v1750 = vld [vmem:[#allocation5 + $0x54] sm:$0xff]
      %v1751 = vld [vmem:[#allocation5 + $0x5c] sm:$0xf]
      %v1752 = vld [vmem:[#allocation5 + $0x60] sm:$0xff]
      %v1753 = vld [vmem:[#allocation5 + $0x68] sm:$0xf]
      %v1754 = vld [vmem:[#allocation5 + $0x6c] sm:$0xff]
      %v1755 = vld [vmem:[#allocation5 + $0x74] sm:$0xf]
      %v1756 = vld [vmem:[#allocation5 + $0x78] sm:$0xff]
      %v1757 = vld [vmem:[#allocation5 + $0x80] sm:$0xf]
      %v1758 = vld [vmem:[#allocation5 + $0x84] sm:$0xff]
      %v1759 = vld [vmem:[#allocation5 + $0x8c] sm:$0xf]
      %v1760 = vld [vmem:[#allocation5 + $0x90] sm:$0xff]
      %v1761 = vld [vmem:[#allocation5 + $0x98] sm:$0xf]
      %v1762 = vld [vmem:[#allocation5 + $0x9c] sm:$0xff]
      %v1763 = vld [vmem:[#allocation5 + $0xa4] sm:$0xf]
      %v1764 = vld [vmem:[#allocation5 + $0xa8] sm:$0xff]
      %v1765 = vld [vmem:[#allocation5 + $0xb0] sm:$0xf]
      %v1766 = vld [vmem:[#allocation5 + $0xb4] sm:$0xff]
      %v1767 = vld [vmem:[#allocation5 + $0xbc] sm:$0xf]
      %v1768 = vld [vmem:[#allocation5 + $0xc0] sm:$0xff]
      %v1769 = vld [vmem:[#allocation5 + $0xc8] sm:$0xf]
      %v1770 = vld [vmem:[#allocation5 + $0xcc] sm:$0xff]
      %v1771 = vld [vmem:[#allocation5 + $0xd4] sm:$0xf]
      %v1772 = vld [vmem:[#allocation5 + $0xd8] sm:$0xff]
      %v1773 = vld [vmem:[#allocation5 + $0xe0] sm:$0xf]
      %v1774 = vld [vmem:[#allocation5 + $0xe4] sm:$0xff]
      %v1775 = vld [vmem:[#allocation5 + $0xec] sm:$0xf]
      %v1776 = vld [vmem:[#allocation5 + $0xf0] sm:$0xff]
      %v1777 = vld [vmem:[#allocation5 + $0xf8] sm:$0xf]
      %v1778 = vld [vmem:[#allocation5 + $0xfc] sm:$0xff]
      %v1779 = vld [vmem:[#allocation5 + $0x104] sm:$0xf]
      %v1780 = vld [vmem:[#allocation5 + $0x108] sm:$0xff]
      %v1781 = vld [vmem:[#allocation5 + $0x110] sm:$0xf]
      %v1782 = vld [vmem:[#allocation5 + $0x114] sm:$0xff]
      %v1783 = vld [vmem:[#allocation5 + $0x11c] sm:$0xf]
      %v1784 = vld [vmem:[#allocation5 + $0x120] sm:$0xff]
      %v1785 = vld [vmem:[#allocation5 + $0x128] sm:$0xf]
      %v1786 = vld [vmem:[#allocation5 + $0x12c] sm:$0xff]
      %v1787 = vld [vmem:[#allocation5 + $0x134] sm:$0xf]
      %v1788 = vld [vmem:[#allocation5 + $0x138] sm:$0xff]
      %v1789 = vld [vmem:[#allocation5 + $0x140] sm:$0xf]
      %v1790 = vld [vmem:[#allocation5 + $0x144] sm:$0xff]
      %v1791 = vld [vmem:[#allocation5 + $0x14c] sm:$0xf]
      %v1792 = vld [vmem:[#allocation5 + $0x150] sm:$0xff]
      %v1793 = vld [vmem:[#allocation5 + $0x158] sm:$0xf]
      %v1794 = vld [vmem:[#allocation5 + $0x15c] sm:$0xff]
      %v1795 = vld [vmem:[#allocation5 + $0x164] sm:$0xf]
      %v1796 = vld [vmem:[#allocation5 + $0x168] sm:$0xff]
      %v1797 = vld [vmem:[#allocation5 + $0x170] sm:$0xf]
      %v1798 = vld [vmem:[#allocation5 + $0x174] sm:$0xff]
      %v1799 = vld [vmem:[#allocation5 + $0x17c] sm:$0xf]
      %v1800 = vld [vmem:[#allocation5 + $0x180] sm:$0xff]
      %v1801 = vld [vmem:[#allocation5 + $0x188] sm:$0xf]
      %v1802 = vld [vmem:[#allocation5 + $0x18c] sm:$0xff]
      %v1803 = vld [vmem:[#allocation5 + $0x194] sm:$0xf]
      %v1804 = vld [vmem:[#allocation5 + $0x198] sm:$0xff]
      %v1805 = vld [vmem:[#allocation5 + $0x1a0] sm:$0xf]
      %v1806 = vld [vmem:[#allocation5 + $0x1a4] sm:$0xff]
      %v1807 = vld [vmem:[#allocation5 + $0x1ac] sm:$0xf]
      %v1808 = vld [vmem:[#allocation5 + $0x1b0] sm:$0xff]
      %v1809 = vld [vmem:[#allocation5 + $0x1b8] sm:$0xf]
      %v1810 = vld [vmem:[#allocation5 + $0x1bc] sm:$0xff]
      %v1811 = vld [vmem:[#allocation5 + $0x1c4] sm:$0xf]
      %v1812 = vld [vmem:[#allocation5 + $0x1c8] sm:$0xff]
      %v1813 = vld [vmem:[#allocation5 + $0x1d0] sm:$0xf]
      %v1814 = vld [vmem:[#allocation5 + $0x1d4] sm:$0xff]
      %v1815 = vld [vmem:[#allocation5 + $0x1dc] sm:$0xf]
      %v1816 = vld [vmem:[#allocation5 + $0x1e0] sm:$0xff]
      %v1817 = vld [vmem:[#allocation5 + $0x1e8] sm:$0xf]
      %v1818 = vld [vmem:[#allocation5 + $0x1ec] sm:$0xff]
      %v1819 = vld [vmem:[#allocation5 + $0x1f4] sm:$0xf]
      %v1820 = vld [vmem:[#allocation5 + $0x1f8] sm:$0xff]
      %v1821 = vld [vmem:[#allocation5 + $0x200] sm:$0xf]
      %v1822 = vld [vmem:[#allocation5 + $0x204] sm:$0xff]
      %v1823 = vld [vmem:[#allocation5 + $0x20c] sm:$0xf]
      %v1824 = vld [vmem:[#allocation5 + $0x210] sm:$0xff]
      %v1825 = vld [vmem:[#allocation5 + $0x218] sm:$0xf]
      %v1826 = vld [vmem:[#allocation5 + $0x21c] sm:$0xff]
      %v1827 = vld [vmem:[#allocation5 + $0x224] sm:$0xf]
      %v1828 = vld [vmem:[#allocation5 + $0x228] sm:$0xff]
      %v1829 = vld [vmem:[#allocation5 + $0x230] sm:$0xf]
      %v1830 = vld [vmem:[#allocation5 + $0x234] sm:$0xff]
      %v1831 = vld [vmem:[#allocation5 + $0x23c] sm:$0xf]
      %v1832 = vld [vmem:[%s4] sm:$0x7]
      %v1834 = vlaneseq
      %v1835 = vshrl.u32 %v1834, 7
      %v1836 = vsub.s32 0, %v1835
      %v1837 = vrot.slane %v1832, %v1836
      %v1838 = vlaneseq
      %v1839 = vshrl.u32 %v1838, 7
      %v1840 = vsub.s32 1, %v1839
      %v1841 = vrot.slane %v1832, %v1840
      %v1842 = vlaneseq
      %v1843 = vshrl.u32 %v1842, 7
      %v1844 = vsub.s32 2, %v1843
      %v1845 = vrot.slane %v1832, %v1844
      %v1945 = vunpack.c.l.b16 %v1736
      %v1946 = vunpack.c.h.b16 %v1736
      %v1947 = vunpack.c.l.b16 %v1737
      %v1948 = vunpack.c.l.b16 %v1738
      %v1949 = vunpack.c.h.b16 %v1738
      %v1950 = vunpack.c.l.b16 %v1739
      %v1951 = vunpack.c.l.b16 %v1740
      %v1952 = vunpack.c.h.b16 %v1740
      %v1953 = vunpack.c.l.b16 %v1741
      %v1954 = vunpack.c.l.b16 %v1742
      %v1955 = vunpack.c.h.b16 %v1742
      %v1956 = vunpack.c.l.b16 %v1743
      %v1957 = vunpack.c.l.b16 %v1744
      %v1958 = vunpack.c.h.b16 %v1744
      %v1959 = vunpack.c.l.b16 %v1745
      %v1960 = vunpack.c.l.b16 %v1746
      %v1961 = vunpack.c.h.b16 %v1746
      %v1962 = vunpack.c.l.b16 %v1747
      %v1963 = vunpack.c.l.b16 %v1748
      %v1964 = vunpack.c.h.b16 %v1748
      %v1965 = vunpack.c.l.b16 %v1749
      %v1966 = vunpack.c.l.b16 %v1750
      %v1967 = vunpack.c.h.b16 %v1750
      %v1968 = vunpack.c.l.b16 %v1751
      %v1969 = vunpack.c.l.b16 %v1752
      %v1970 = vunpack.c.h.b16 %v1752
      %v1971 = vunpack.c.l.b16 %v1753
      %v1972 = vunpack.c.l.b16 %v1754
      %v1973 = vunpack.c.h.b16 %v1754
      %v1974 = vunpack.c.l.b16 %v1755
      %v1975 = vunpack.c.l.b16 %v1756
      %v1976 = vunpack.c.h.b16 %v1756
      %v1977 = vunpack.c.l.b16 %v1757
      %v1978 = vunpack.c.l.b16 %v1758
      %v1979 = vunpack.c.h.b16 %v1758
      %v1980 = vunpack.c.l.b16 %v1759
      %v1981 = vunpack.c.l.b16 %v1760
      %v1982 = vunpack.c.h.b16 %v1760
      %v1983 = vunpack.c.l.b16 %v1761
      %v1984 = vunpack.c.l.b16 %v1762
      %v1985 = vunpack.c.h.b16 %v1762
      %v1986 = vunpack.c.l.b16 %v1763
      %v1987 = vunpack.c.l.b16 %v1764
      %v1988 = vunpack.c.h.b16 %v1764
      %v1989 = vunpack.c.l.b16 %v1765
      %v1990 = vunpack.c.l.b16 %v1766
      %v1991 = vunpack.c.h.b16 %v1766
      %v1992 = vunpack.c.l.b16 %v1767
      %v1993 = vunpack.c.l.b16 %v1768
      %v1994 = vunpack.c.h.b16 %v1768
      %v1995 = vunpack.c.l.b16 %v1769
      %v1996 = vunpack.c.l.b16 %v1770
      %v1997 = vunpack.c.h.b16 %v1770
      %v1998 = vunpack.c.l.b16 %v1771
      %v1999 = vunpack.c.l.b16 %v1772
      %v2000 = vunpack.c.h.b16 %v1772
      %v2001 = vunpack.c.l.b16 %v1773
      %v2002 = vunpack.c.l.b16 %v1774
      %v2003 = vunpack.c.h.b16 %v1774
      %v2004 = vunpack.c.l.b16 %v1775
      %v2005 = vunpack.c.l.b16 %v1776
      %v2006 = vunpack.c.h.b16 %v1776
      %v2007 = vunpack.c.l.b16 %v1777
      %v2008 = vunpack.c.l.b16 %v1778
      %v2009 = vunpack.c.h.b16 %v1778
      %v2010 = vunpack.c.l.b16 %v1779
      %v2011 = vunpack.c.l.b16 %v1780
      %v2012 = vunpack.c.h.b16 %v1780
      %v2013 = vunpack.c.l.b16 %v1781
      %v2014 = vunpack.c.l.b16 %v1782
      %v2015 = vunpack.c.h.b16 %v1782
      %v2016 = vunpack.c.l.b16 %v1783
      %v2017 = vunpack.c.l.b16 %v1784
      %v2018 = vunpack.c.h.b16 %v1784
      %v2019 = vunpack.c.l.b16 %v1785
      %v2020 = vunpack.c.l.b16 %v1786
      %v2021 = vunpack.c.h.b16 %v1786
      %v2022 = vunpack.c.l.b16 %v1787
      %v2023 = vunpack.c.l.b16 %v1788
      %v2024 = vunpack.c.h.b16 %v1788
      %v2025 = vunpack.c.l.b16 %v1789
      %v2026 = vunpack.c.l.b16 %v1790
      %v2027 = vunpack.c.h.b16 %v1790
      %v2028 = vunpack.c.l.b16 %v1791
      %v2029 = vunpack.c.l.b16 %v1792
      %v2030 = vunpack.c.h.b16 %v1792
      %v2031 = vunpack.c.l.b16 %v1793
      %v2032 = vunpack.c.l.b16 %v1794
      %v2033 = vunpack.c.h.b16 %v1794
      %v2034 = vunpack.c.l.b16 %v1795
      %v2035 = vunpack.c.l.b16 %v1796
      %v2036 = vunpack.c.h.b16 %v1796
      %v2037 = vunpack.c.l.b16 %v1797
      %v2038 = vunpack.c.l.b16 %v1798
      %v2039 = vunpack.c.h.b16 %v1798
      %v2040 = vunpack.c.l.b16 %v1799
      %v2041 = vunpack.c.l.b16 %v1800
      %v2042 = vunpack.c.h.b16 %v1800
      %v2043 = vunpack.c.l.b16 %v1801
      %v2044 = vunpack.c.l.b16 %v1802
      %v2045 = vunpack.c.h.b16 %v1802
      %v2046 = vunpack.c.l.b16 %v1803
      %v2047 = vunpack.c.l.b16 %v1804
      %v2048 = vunpack.c.h.b16 %v1804
      %v2049 = vunpack.c.l.b16 %v1805
      %v2050 = vunpack.c.l.b16 %v1806
      %v2051 = vunpack.c.h.b16 %v1806
      %v2052 = vunpack.c.l.b16 %v1807
      %v2053 = vunpack.c.l.b16 %v1808
      %v2054 = vunpack.c.h.b16 %v1808
      %v2055 = vunpack.c.l.b16 %v1809
      %v2056 = vunpack.c.l.b16 %v1810
      %v2057 = vunpack.c.h.b16 %v1810
      %v2058 = vunpack.c.l.b16 %v1811
      %v2059 = vunpack.c.l.b16 %v1812
      %v2060 = vunpack.c.h.b16 %v1812
      %v2061 = vunpack.c.l.b16 %v1813
      %v2062 = vunpack.c.l.b16 %v1814
      %v2063 = vunpack.c.h.b16 %v1814
      %v2064 = vunpack.c.l.b16 %v1815
      %v2065 = vunpack.c.l.b16 %v1816
      %v2066 = vunpack.c.h.b16 %v1816
      %v2067 = vunpack.c.l.b16 %v1817
      %v2068 = vunpack.c.l.b16 %v1818
      %v2069 = vunpack.c.h.b16 %v1818
      %v2070 = vunpack.c.l.b16 %v1819
      %v2071 = vunpack.c.l.b16 %v1820
      %v2072 = vunpack.c.h.b16 %v1820
      %v2073 = vunpack.c.l.b16 %v1821
      %v2074 = vunpack.c.l.b16 %v1822
      %v2075 = vunpack.c.h.b16 %v1822
      %v2076 = vunpack.c.l.b16 %v1823
      %v2077 = vunpack.c.l.b16 %v1824
      %v2078 = vunpack.c.h.b16 %v1824
      %v2079 = vunpack.c.l.b16 %v1825
      %v2080 = vunpack.c.l.b16 %v1826
      %v2081 = vunpack.c.h.b16 %v1826
      %v2082 = vunpack.c.l.b16 %v1827
      %v2083 = vunpack.c.l.b16 %v1828
      %v2084 = vunpack.c.h.b16 %v1828
      %v2085 = vunpack.c.l.b16 %v1829
      %v2086 = vunpack.c.l.b16 %v1830
      %v2087 = vunpack.c.h.b16 %v1830
      %v2088 = vunpack.c.l.b16 %v1831
      %v2089 = vpack.c.b16 %v1948, %v1945
      %v2090 = vpack.c.b16 %v1949, %v1946
      %v2091 = vpack.c.b16 %v1950, %v1947
      %v2092 = vpack.c.b16 %v1954, %v1951
      %v2093 = vpack.c.b16 %v1955, %v1952
      %v2094 = vpack.c.b16 %v1956, %v1953
      %v2095 = vpack.c.b16 %v1960, %v1957
      %v2096 = vpack.c.b16 %v1961, %v1958
      %v2097 = vpack.c.b16 %v1962, %v1959
      %v2098 = vpack.c.b16 %v1966, %v1963
      %v2099 = vpack.c.b16 %v1967, %v1964
      %v2100 = vpack.c.b16 %v1968, %v1965
      %v2101 = vpack.c.b16 %v1972, %v1969
      %v2102 = vpack.c.b16 %v1973, %v1970
      %v2103 = vpack.c.b16 %v1974, %v1971
      %v2104 = vpack.c.b16 %v1978, %v1975
      %v2105 = vpack.c.b16 %v1979, %v1976
      %v2106 = vpack.c.b16 %v1980, %v1977
      %v2107 = vpack.c.b16 %v1984, %v1981
      %v2108 = vpack.c.b16 %v1985, %v1982
      %v2109 = vpack.c.b16 %v1986, %v1983
      %v2110 = vpack.c.b16 %v1990, %v1987
      %v2111 = vpack.c.b16 %v1991, %v1988
      %v2112 = vpack.c.b16 %v1992, %v1989
      %v2113 = vpack.c.b16 %v1996, %v1993
      %v2114 = vpack.c.b16 %v1997, %v1994
      %v2115 = vpack.c.b16 %v1998, %v1995
      %v2116 = vpack.c.b16 %v2002, %v1999
      %v2117 = vpack.c.b16 %v2003, %v2000
      %v2118 = vpack.c.b16 %v2004, %v2001
      %v2119 = vpack.c.b16 %v2008, %v2005
      %v2120 = vpack.c.b16 %v2009, %v2006
      %v2121 = vpack.c.b16 %v2010, %v2007
      %v2122 = vpack.c.b16 %v2014, %v2011
      %v2123 = vpack.c.b16 %v2015, %v2012
      %v2124 = vpack.c.b16 %v2016, %v2013
      %v2125 = vpack.c.b16 %v2020, %v2017
      %v2126 = vpack.c.b16 %v2021, %v2018
      %v2127 = vpack.c.b16 %v2022, %v2019
      %v2128 = vpack.c.b16 %v2026, %v2023
      %v2129 = vpack.c.b16 %v2027, %v2024
      %v2130 = vpack.c.b16 %v2028, %v2025
      %v2131 = vpack.c.b16 %v2032, %v2029
      %v2132 = vpack.c.b16 %v2033, %v2030
      %v2133 = vpack.c.b16 %v2034, %v2031
      %v2134 = vpack.c.b16 %v2038, %v2035
      %v2135 = vpack.c.b16 %v2039, %v2036
      %v2136 = vpack.c.b16 %v2040, %v2037
      %v2137 = vpack.c.b16 %v2044, %v2041
      %v2138 = vpack.c.b16 %v2045, %v2042
      %v2139 = vpack.c.b16 %v2046, %v2043
      %v2140 = vpack.c.b16 %v2050, %v2047
      %v2141 = vpack.c.b16 %v2051, %v2048
      %v2142 = vpack.c.b16 %v2052, %v2049
      %v2143 = vpack.c.b16 %v2056, %v2053
      %v2144 = vpack.c.b16 %v2057, %v2054
      %v2145 = vpack.c.b16 %v2058, %v2055
      %v2146 = vpack.c.b16 %v2062, %v2059
      %v2147 = vpack.c.b16 %v2063, %v2060
      %v2148 = vpack.c.b16 %v2064, %v2061
      %v2149 = vpack.c.b16 %v2068, %v2065
      %v2150 = vpack.c.b16 %v2069, %v2066
      %v2151 = vpack.c.b16 %v2070, %v2067
      %v2152 = vpack.c.b16 %v2074, %v2071
      %v2153 = vpack.c.b16 %v2075, %v2072
      %v2154 = vpack.c.b16 %v2076, %v2073
      %v2155 = vpack.c.b16 %v2080, %v2077
      %v2156 = vpack.c.b16 %v2081, %v2078
      %v2157 = vpack.c.b16 %v2082, %v2079
      %v2158 = vpack.c.b16 %v2086, %v2083
      %v2159 = vpack.c.b16 %v2087, %v2084
      %v2160 = vpack.c.b16 %v2088, %v2085
      %2233 = vmatprep.subr.bf16.mxu0 %v2111
      %2234 = vmatpush1.bf16.msra.mxu0 %v2110
      %2235 = vmatprep.subr.bf16.mxu0 %v2108
      %2236 = vmatpush1.bf16.msra.mxu0 %v2107
      %2237 = vmatprep.subr.bf16.mxu0 %v2105
      %2238 = vmatpush1.bf16.msra.mxu0 %v2104
      %2239 = vmatprep.subr.bf16.mxu0 %v2102
      %2240 = vmatpush1.bf16.msra.mxu0 %v2101
      %2241 = vmatprep.subr.bf16.mxu0 %v2099
      %2242 = vmatpush1.bf16.msra.mxu0 %v2098
      %2243 = vmatprep.subr.bf16.mxu0 %v2096
      %2244 = vmatpush1.bf16.msra.mxu0 %v2095
      %2245 = vmatprep.subr.bf16.mxu0 %v2093
      %2246 = vmatpush1.bf16.msra.mxu0 %v2092
      %2247 = vmatprep.subr.bf16.mxu0 %v2090
      %2248 = vmatpush1.bf16.msra.mxu0 %v2089
      %2249 = vmatprep.subr.bf16.mxu0 %v2135
      %2250 = vmatpush2.bf16.msra.mxu0 %v2134
      %2251 = vmatprep.subr.bf16.mxu0 %v2132
      %2252 = vmatpush2.bf16.msra.mxu0 %v2131
      %2253 = vmatprep.subr.bf16.mxu0 %v2129
      %2254 = vmatpush2.bf16.msra.mxu0 %v2128
      %2255 = vmatprep.subr.bf16.mxu0 %v2126
      %2256 = vmatpush2.bf16.msra.mxu0 %v2125
      %2257 = vmatprep.subr.bf16.mxu0 %v2123
      %2258 = vmatpush2.bf16.msra.mxu0 %v2122
      %2259 = vmatprep.subr.bf16.mxu0 %v2120
      %2260 = vmatpush2.bf16.msra.mxu0 %v2119
      %2261 = vmatprep.subr.bf16.mxu0 %v2117
      %2262 = vmatpush2.bf16.msra.mxu0 %v2116
      %2263 = vmatprep.subr.bf16.mxu0 %v2114
      %2264 = vmatpush2.bf16.msra.mxu0 %v2113
      %2265 = vmatprep.mubr.bf16.mxu0 %v1734
      %2266 = vmatmul.mubr.bf16.gmra.mxu0 %v1733
      %v2267 = vpop.f32.mrf.mxu0
      %v2268 = vadd.f32 %v1837, %v2267
      %v2269 = vpop.f32.mrf.mxu0
      %v2270 = vadd.f32 %v1841, %v2269
      %v2271 = vpop.f32.mrf.mxu0
      %v2272 = vpop.f32.mrf.mxu0
      %2273 = vdwg.mxu0
      %2274 = vmatprep.subr.bf16.mxu0 %v2159
      %2275 = vmatpush1.bf16.msra.mxu0 %v2158
      %2276 = vmatprep.subr.bf16.mxu0 %v2156
      %2277 = vmatpush1.bf16.msra.mxu0 %v2155
      %2278 = vmatprep.subr.bf16.mxu0 %v2153
      %2279 = vmatpush1.bf16.msra.mxu0 %v2152
      %2280 = vmatprep.subr.bf16.mxu0 %v2150
      %2281 = vmatpush1.bf16.msra.mxu0 %v2149
      %2282 = vmatprep.subr.bf16.mxu0 %v2147
      %2283 = vmatpush1.bf16.msra.mxu0 %v2146
      %2284 = vmatprep.subr.bf16.mxu0 %v2144
      %2285 = vmatpush1.bf16.msra.mxu0 %v2143
      %2286 = vmatprep.subr.bf16.mxu0 %v2141
      %2287 = vmatpush1.bf16.msra.mxu0 %v2140
      %2288 = vmatprep.subr.bf16.mxu0 %v2138
      %2289 = vmatpush1.bf16.msra.mxu0 %v2137
      %2290 = vmatprep.subr.bf16.mxu0 0
      %2291 = vmatpush2.bf16.msra.mxu0 0
      %2292 = vmatprep.subr.bf16.mxu0 0
      %2293 = vmatpush2.bf16.msra.mxu0 0
      %2294 = vmatprep.subr.bf16.mxu0 0
      %2295 = vmatpush2.bf16.msra.mxu0 0
      %2296 = vmatprep.subr.bf16.mxu0 0
      %2297 = vmatpush2.bf16.msra.mxu0 0
      %2298 = vmatprep.subr.bf16.mxu0 0
      %2299 = vmatpush2.bf16.msra.mxu0 0
      %2300 = vmatprep.subr.bf16.mxu0 0
      %2301 = vmatpush2.bf16.msra.mxu0 0
      %2302 = vmatprep.subr.bf16.mxu0 0
      %2303 = vmatpush2.bf16.msra.mxu0 0
      %2304 = vmatprep.subr.bf16.mxu0 0
      %2305 = vmatpush2.bf16.msra.mxu0 0
      %2306 = vmatprep.mubr.bf16.mxu0 0
      %2307 = vmatmul.mubr.bf16.gmra.mxu0 %v1735
      %v2308 = vpop.f32.mrf.mxu0
      %v2309 = vadd.f32 %v2268, %v2308
      %v2310 = vpop.f32.mrf.mxu0
      %v2311 = vadd.f32 %v2270, %v2310
      %v2312 = vpop.f32.mrf.mxu0
      %v2313 = vpop.f32.mrf.mxu0
      %2314 = vdwg.mxu0
      %2315 = vmatprep.subr.bf16.mxu0 0
      %2316 = vmatpush1.bf16.msra.mxu0 %v2112
      %2317 = vmatprep.subr.bf16.mxu0 0
      %2318 = vmatpush1.bf16.msra.mxu0 %v2109
      %2319 = vmatprep.subr.bf16.mxu0 0
      %2320 = vmatpush1.bf16.msra.mxu0 %v2106
      %2321 = vmatprep.subr.bf16.mxu0 0
      %2322 = vmatpush1.bf16.msra.mxu0 %v2103
      %2323 = vmatprep.subr.bf16.mxu0 0
      %2324 = vmatpush1.bf16.msra.mxu0 %v2100
      %2325 = vmatprep.subr.bf16.mxu0 0
      %2326 = vmatpush1.bf16.msra.mxu0 %v2097
      %2327 = vmatprep.subr.bf16.mxu0 0
      %2328 = vmatpush1.bf16.msra.mxu0 %v2094
      %2329 = vmatprep.subr.bf16.mxu0 0
      %2330 = vmatpush1.bf16.msra.mxu0 %v2091
      %2331 = vmatprep.subr.bf16.mxu0 0
      %2332 = vmatpush2.bf16.msra.mxu0 %v2136
      %2333 = vmatprep.subr.bf16.mxu0 0
      %2334 = vmatpush2.bf16.msra.mxu0 %v2133
      %2335 = vmatprep.subr.bf16.mxu0 0
      %2336 = vmatpush2.bf16.msra.mxu0 %v2130
      %2337 = vmatprep.subr.bf16.mxu0 0
      %2338 = vmatpush2.bf16.msra.mxu0 %v2127
      %2339 = vmatprep.subr.bf16.mxu0 0
      %2340 = vmatpush2.bf16.msra.mxu0 %v2124
      %2341 = vmatprep.subr.bf16.mxu0 0
      %2342 = vmatpush2.bf16.msra.mxu0 %v2121
      %2343 = vmatprep.subr.bf16.mxu0 0
      %2344 = vmatpush2.bf16.msra.mxu0 %v2118
      %2345 = vmatprep.subr.bf16.mxu0 0
      %2346 = vmatpush2.bf16.msra.mxu0 %v2115
      %2347 = vmatprep.mubr.bf16.mxu0 %v1734
      %2348 = vmatmul.mubr.bf16.gmra.mxu0 %v1733
      %v2349 = vpop.f32.mrf.mxu0
      %v2350 = vadd.f32 %v1845, %v2349
      %v2351 = vpop.f32.mrf.mxu0
      %v2352 = vpop.f32.mrf.mxu0
      %v2353 = vpop.f32.mrf.mxu0
      %2354 = vdwg.mxu0
      %2355 = vmatprep.subr.bf16.mxu0 0
      %2356 = vmatpush1.bf16.msra.mxu0 %v2160
      %2357 = vmatprep.subr.bf16.mxu0 0
      %2358 = vmatpush1.bf16.msra.mxu0 %v2157
      %2359 = vmatprep.subr.bf16.mxu0 0
      %2360 = vmatpush1.bf16.msra.mxu0 %v2154
      %2361 = vmatprep.subr.bf16.mxu0 0
      %2362 = vmatpush1.bf16.msra.mxu0 %v2151
      %2363 = vmatprep.subr.bf16.mxu0 0
      %2364 = vmatpush1.bf16.msra.mxu0 %v2148
      %2365 = vmatprep.subr.bf16.mxu0 0
      %2366 = vmatpush1.bf16.msra.mxu0 %v2145
      %2367 = vmatprep.subr.bf16.mxu0 0
      %2368 = vmatpush1.bf16.msra.mxu0 %v2142
      %2369 = vmatprep.subr.bf16.mxu0 0
      %2370 = vmatpush1.bf16.msra.mxu0 %v2139
      %2371 = vmatprep.subr.bf16.mxu0 0
      %2372 = vmatpush2.bf16.msra.mxu0 0
      %2373 = vmatprep.subr.bf16.mxu0 0
      %2374 = vmatpush2.bf16.msra.mxu0 0
      %2375 = vmatprep.subr.bf16.mxu0 0
      %2376 = vmatpush2.bf16.msra.mxu0 0
      %2377 = vmatprep.subr.bf16.mxu0 0
      %2378 = vmatpush2.bf16.msra.mxu0 0
      %2379 = vmatprep.subr.bf16.mxu0 0
      %2380 = vmatpush2.bf16.msra.mxu0 0
      %2381 = vmatprep.subr.bf16.mxu0 0
      %2382 = vmatpush2.bf16.msra.mxu0 0
      %2383 = vmatprep.subr.bf16.mxu0 0
      %2384 = vmatpush2.bf16.msra.mxu0 0
      %2385 = vmatprep.subr.bf16.mxu0 0
      %2386 = vmatpush2.bf16.msra.mxu0 0
      %2387 = vmatprep.mubr.bf16.mxu0 0
      %2388 = vmatmul.mubr.bf16.gmra.mxu0 %v1735
      %v2389 = vpop.f32.mrf.mxu0
      %v2390 = vadd.f32 %v2350, %v2389
      %v2391 = vpop.f32.mrf.mxu0
      %v2392 = vpop.f32.mrf.mxu0
      %v2393 = vpop.f32.mrf.mxu0
      %2394 = vdwg.mxu0
      %v2395 = vmax.f32 %v2309, 0.0
      %v2396 = vmax.f32 %v2311, 0.0
      %v2397 = vmax.f32 %v2390, 0.0
      %v2398 = vpack.c.bf16 %v2395, %v2395
      %v2399 = vpack.c.bf16 %v2396, %v2396
      %v2400 = vpack.c.bf16 %v2397, %v2397
      %v2401 = vld [vmem:[#allocation7] sm:$0xf]
      %v2402 = vld [vmem:[#allocation7 + $0x4] sm:$0xf]
      %v2403 = vld [vmem:[#allocation7 + $0x8] sm:$0xf]
      %v2404 = vld [vmem:[#allocation7 + $0xc] sm:$0xf]
      %v2405 = vld [vmem:[#allocation7 + $0x10] sm:$0xf]
      %v2406 = vld [vmem:[#allocation7 + $0x14] sm:$0xf]
      %v2407 = vld [vmem:[#allocation7 + $0x18] sm:$0xf]
      %v2408 = vld [vmem:[#allocation7 + $0x1c] sm:$0xf]
      %v2409 = vld [vmem:[#allocation7 + $0x20] sm:$0xf]
      %v2410 = vld [vmem:[#allocation7 + $0x24] sm:$0xf]
      %v2411 = vld [vmem:[#allocation7 + $0x28] sm:$0xf]
      %v2412 = vld [vmem:[#allocation7 + $0x2c] sm:$0xf]
      %v2413 = vld [vmem:[#allocation7 + $0x30] sm:$0xf]
      %v2414 = vld [vmem:[#allocation7 + $0x34] sm:$0xf]
      %v2415 = vld [vmem:[#allocation7 + $0x38] sm:$0xf]
      %v2416 = vld [vmem:[#allocation7 + $0x3c] sm:$0xf]
      %v2417 = vld [vmem:[#allocation7 + $0x40] sm:$0xf]
      %v2418 = vld [vmem:[#allocation7 + $0x44] sm:$0xf]
      %v2419 = vld [vmem:[#allocation7 + $0x48] sm:$0xf]
      %v2420 = vld [vmem:[#allocation7 + $0x4c] sm:$0xf]
      %v2421 = vld [vmem:[#allocation7 + $0x50] sm:$0xf]
      %v2422 = vld [vmem:[#allocation7 + $0x54] sm:$0xf]
      %v2423 = vld [vmem:[#allocation7 + $0x58] sm:$0xf]
      %v2424 = vld [vmem:[#allocation7 + $0x5c] sm:$0xf]
      %v2425 = vld [vmem:[#allocation7 + $0x60] sm:$0xf]
      %v2426 = vld [vmem:[#allocation7 + $0x64] sm:$0xf]
      %v2427 = vld [vmem:[#allocation7 + $0x68] sm:$0xf]
      %v2428 = vld [vmem:[#allocation7 + $0x6c] sm:$0xf]
      %v2429 = vld [vmem:[#allocation7 + $0x70] sm:$0xf]
      %v2430 = vld [vmem:[#allocation7 + $0x74] sm:$0xf]
      %v2431 = vld [vmem:[#allocation7 + $0x78] sm:$0xf]
      %v2432 = vld [vmem:[#allocation7 + $0x7c] sm:$0xf]
      %v2433 = vld [vmem:[#allocation7 + $0x80] sm:$0xf]
      %v2434 = vld [vmem:[#allocation7 + $0x84] sm:$0xf]
      %v2435 = vld [vmem:[#allocation7 + $0x88] sm:$0xf]
      %v2436 = vld [vmem:[#allocation7 + $0x8c] sm:$0xf]
      %v2437 = vld [vmem:[#allocation7 + $0x90] sm:$0xf]
      %v2438 = vld [vmem:[#allocation7 + $0x94] sm:$0xf]
      %v2439 = vld [vmem:[#allocation7 + $0x98] sm:$0xf]
      %v2440 = vld [vmem:[#allocation7 + $0x9c] sm:$0xf]
      %v2441 = vld [vmem:[#allocation7 + $0xa0] sm:$0xf]
      %v2442 = vld [vmem:[#allocation7 + $0xa4] sm:$0xf]
      %v2443 = vld [vmem:[#allocation7 + $0xa8] sm:$0xf]
      %v2444 = vld [vmem:[#allocation7 + $0xac] sm:$0xf]
      %v2445 = vld [vmem:[#allocation7 + $0xb0] sm:$0xf]
      %v2446 = vld [vmem:[#allocation7 + $0xb4] sm:$0xf]
      %v2447 = vld [vmem:[#allocation7 + $0xb8] sm:$0xf]
      %v2448 = vld [vmem:[#allocation7 + $0xbc] sm:$0xf]
      %v2449 = vld [vmem:[%s6] sm:$0x1]
      %v2451 = vlaneseq
      %v2452 = vshrl.u32 %v2451, 7
      %v2453 = vsub.s32 0, %v2452
      %v2454 = vrot.slane %v2449, %v2453
      %v2504 = vunpack.c.l.b16 %v2401
      %v2505 = vunpack.c.l.b16 %v2402
      %v2506 = vunpack.c.l.b16 %v2403
      %v2507 = vunpack.c.l.b16 %v2404
      %v2508 = vunpack.c.l.b16 %v2405
      %v2509 = vunpack.c.l.b16 %v2406
      %v2510 = vunpack.c.l.b16 %v2407
      %v2511 = vunpack.c.l.b16 %v2408
      %v2512 = vunpack.c.l.b16 %v2409
      %v2513 = vunpack.c.l.b16 %v2410
      %v2514 = vunpack.c.l.b16 %v2411
      %v2515 = vunpack.c.l.b16 %v2412
      %v2516 = vunpack.c.l.b16 %v2413
      %v2517 = vunpack.c.l.b16 %v2414
      %v2518 = vunpack.c.l.b16 %v2415
      %v2519 = vunpack.c.l.b16 %v2416
      %v2520 = vunpack.c.l.b16 %v2417
      %v2521 = vunpack.c.l.b16 %v2418
      %v2522 = vunpack.c.l.b16 %v2419
      %v2523 = vunpack.c.l.b16 %v2420
      %v2524 = vunpack.c.l.b16 %v2421
      %v2525 = vunpack.c.l.b16 %v2422
      %v2526 = vunpack.c.l.b16 %v2423
      %v2527 = vunpack.c.l.b16 %v2424
      %v2528 = vunpack.c.l.b16 %v2425
      %v2529 = vunpack.c.l.b16 %v2426
      %v2530 = vunpack.c.l.b16 %v2427
      %v2531 = vunpack.c.l.b16 %v2428
      %v2532 = vunpack.c.l.b16 %v2429
      %v2533 = vunpack.c.l.b16 %v2430
      %v2534 = vunpack.c.l.b16 %v2431
      %v2535 = vunpack.c.l.b16 %v2432
      %v2536 = vunpack.c.l.b16 %v2433
      %v2537 = vunpack.c.l.b16 %v2434
      %v2538 = vunpack.c.l.b16 %v2435
      %v2539 = vunpack.c.l.b16 %v2436
      %v2540 = vunpack.c.l.b16 %v2437
      %v2541 = vunpack.c.l.b16 %v2438
      %v2542 = vunpack.c.l.b16 %v2439
      %v2543 = vunpack.c.l.b16 %v2440
      %v2544 = vunpack.c.l.b16 %v2441
      %v2545 = vunpack.c.l.b16 %v2442
      %v2546 = vunpack.c.l.b16 %v2443
      %v2547 = vunpack.c.l.b16 %v2444
      %v2548 = vunpack.c.l.b16 %v2445
      %v2549 = vunpack.c.l.b16 %v2446
      %v2550 = vunpack.c.l.b16 %v2447
      %v2551 = vunpack.c.l.b16 %v2448
      %v2552 = vpack.c.b16 %v2505, %v2504
      %v2553 = vpack.c.b16 %v2507, %v2506
      %v2554 = vpack.c.b16 %v2509, %v2508
      %v2555 = vpack.c.b16 %v2511, %v2510
      %v2556 = vpack.c.b16 %v2513, %v2512
      %v2557 = vpack.c.b16 %v2515, %v2514
      %v2558 = vpack.c.b16 %v2517, %v2516
      %v2559 = vpack.c.b16 %v2519, %v2518
      %v2560 = vpack.c.b16 %v2521, %v2520
      %v2561 = vpack.c.b16 %v2523, %v2522
      %v2562 = vpack.c.b16 %v2525, %v2524
      %v2563 = vpack.c.b16 %v2527, %v2526
      %v2564 = vpack.c.b16 %v2529, %v2528
      %v2565 = vpack.c.b16 %v2531, %v2530
      %v2566 = vpack.c.b16 %v2533, %v2532
      %v2567 = vpack.c.b16 %v2535, %v2534
      %v2568 = vpack.c.b16 %v2537, %v2536
      %v2569 = vpack.c.b16 %v2539, %v2538
      %v2570 = vpack.c.b16 %v2541, %v2540
      %v2571 = vpack.c.b16 %v2543, %v2542
      %v2572 = vpack.c.b16 %v2545, %v2544
      %v2573 = vpack.c.b16 %v2547, %v2546
      %v2574 = vpack.c.b16 %v2549, %v2548
      %v2575 = vpack.c.b16 %v2551, %v2550
      %2600 = vmatprep.subr.bf16.mxu0 0
      %2601 = vmatpush1.bf16.msra.mxu0 %v2559
      %2602 = vmatprep.subr.bf16.mxu0 0
      %2603 = vmatpush1.bf16.msra.mxu0 %v2558
      %2604 = vmatprep.subr.bf16.mxu0 0
      %2605 = vmatpush1.bf16.msra.mxu0 %v2557
      %2606 = vmatprep.subr.bf16.mxu0 0
      %2607 = vmatpush1.bf16.msra.mxu0 %v2556
      %2608 = vmatprep.subr.bf16.mxu0 0
      %2609 = vmatpush1.bf16.msra.mxu0 %v2555
      %2610 = vmatprep.subr.bf16.mxu0 0
      %2611 = vmatpush1.bf16.msra.mxu0 %v2554
      %2612 = vmatprep.subr.bf16.mxu0 0
      %2613 = vmatpush1.bf16.msra.mxu0 %v2553
      %2614 = vmatprep.subr.bf16.mxu0 0
      %2615 = vmatpush1.bf16.msra.mxu0 %v2552
      %2616 = vmatprep.subr.bf16.mxu0 0
      %2617 = vmatpush2.bf16.msra.mxu0 %v2567
      %2618 = vmatprep.subr.bf16.mxu0 0
      %2619 = vmatpush2.bf16.msra.mxu0 %v2566
      %2620 = vmatprep.subr.bf16.mxu0 0
      %2621 = vmatpush2.bf16.msra.mxu0 %v2565
      %2622 = vmatprep.subr.bf16.mxu0 0
      %2623 = vmatpush2.bf16.msra.mxu0 %v2564
      %2624 = vmatprep.subr.bf16.mxu0 0
      %2625 = vmatpush2.bf16.msra.mxu0 %v2563
      %2626 = vmatprep.subr.bf16.mxu0 0
      %2627 = vmatpush2.bf16.msra.mxu0 %v2562
      %2628 = vmatprep.subr.bf16.mxu0 0
      %2629 = vmatpush2.bf16.msra.mxu0 %v2561
      %2630 = vmatprep.subr.bf16.mxu0 0
      %2631 = vmatpush2.bf16.msra.mxu0 %v2560
      %2632 = vmatprep.mubr.bf16.mxu0 %v2399
      %2633 = vmatmul.mubr.bf16.gmra.mxu0 %v2398
      %v2634 = vpop.f32.mrf.mxu0
      %v2635 = vadd.f32 %v2454, %v2634
      %v2636 = vpop.f32.mrf.mxu0
      %v2637 = vpop.f32.mrf.mxu0
      %v2638 = vpop.f32.mrf.mxu0
      %2639 = vdwg.mxu0
      %2640 = vmatprep.subr.bf16.mxu0 0
      %2641 = vmatpush1.bf16.msra.mxu0 %v2575
      %2642 = vmatprep.subr.bf16.mxu0 0
      %2643 = vmatpush1.bf16.msra.mxu0 %v2574
      %2644 = vmatprep.subr.bf16.mxu0 0
      %2645 = vmatpush1.bf16.msra.mxu0 %v2573
      %2646 = vmatprep.subr.bf16.mxu0 0
      %2647 = vmatpush1.bf16.msra.mxu0 %v2572
      %2648 = vmatprep.subr.bf16.mxu0 0
      %2649 = vmatpush1.bf16.msra.mxu0 %v2571
      %2650 = vmatprep.subr.bf16.mxu0 0
      %2651 = vmatpush1.bf16.msra.mxu0 %v2570
      %2652 = vmatprep.subr.bf16.mxu0 0
      %2653 = vmatpush1.bf16.msra.mxu0 %v2569
      %2654 = vmatprep.subr.bf16.mxu0 0
      %2655 = vmatpush1.bf16.msra.mxu0 %v2568
      %2656 = vmatprep.subr.bf16.mxu0 0
      %2657 = vmatpush2.bf16.msra.mxu0 0
      %2658 = vmatprep.subr.bf16.mxu0 0
      %2659 = vmatpush2.bf16.msra.mxu0 0
      %2660 = vmatprep.subr.bf16.mxu0 0
      %2661 = vmatpush2.bf16.msra.mxu0 0
      %2662 = vmatprep.subr.bf16.mxu0 0
      %2663 = vmatpush2.bf16.msra.mxu0 0
      %2664 = vmatprep.subr.bf16.mxu0 0
      %2665 = vmatpush2.bf16.msra.mxu0 0
      %2666 = vmatprep.subr.bf16.mxu0 0
      %2667 = vmatpush2.bf16.msra.mxu0 0
      %2668 = vmatprep.subr.bf16.mxu0 0
      %2669 = vmatpush2.bf16.msra.mxu0 0
      %2670 = vmatprep.subr.bf16.mxu0 0
      %2671 = vmatpush2.bf16.msra.mxu0 0
      %2672 = vmatprep.mubr.bf16.mxu0 0
      %2673 = vmatmul.mubr.bf16.gmra.mxu0 %v2400
      %v2674 = vpop.f32.mrf.mxu0
      %v2675 = vadd.f32 %v2635, %v2674
      %v2676 = vpop.f32.mrf.mxu0
      %v2677 = vpop.f32.mrf.mxu0
      %v2678 = vpop.f32.mrf.mxu0
      %2679 = vdwg.mxu0
      %2680 = vmax.xlane.f32.xlu0 %v2675
      %v2681 = vpop.xlane.xlu0 %2680
      %v2682 = vsub.f32 %v2675, %v2681
      %v2683 = vmul.f32 %v2682, 1.442695
      %v2684 = vpow.pop %v2683
      %2685 = vadd.xlane.f32.xlu0 %v2684
      %v2686 = vpop.xlane.xlu0 %2685
      %v2687 = vrcp.pop %v2686
      %v2688 = vmul.f32 %v2684, %v2687
      %2689 = vst [vmem:[%s7] sm:$0xff] %v2688
    $region49: #{language_discriminator_forward.1} parent=1 // pred_fallthru
      _
    // Predicated region
    $region50: #{language_discriminator_forward.1} parent=1 // pred_check
      _
    $region51: #{language_discriminator_forward.1} parent=1 // pred_check_branch
      %2691 = sbr.rel (0) target = $region53
    $region52: #{language_discriminator_forward.1} parent=1 // pred_region
      _
    $region53: #{language_discriminator_forward.1} parent=1 // pred_fallthru
      _
    // Predicated region
    $region54: #{language_discriminator_forward.1} parent=1 // pred_check
      _
    $region55: #{language_discriminator_forward.1} parent=1 // pred_check_branch
      %2693 = sbr.rel (0) target = $region57
    $region56: #{language_discriminator_forward.1} parent=1 // pred_region
      _
    $region57: #{language_discriminator_forward.1} parent=1 // pred_fallthru
      _
    %2694 = vsyncpa [#allocation4], 1
    %2695 = vsyncpa [#allocation6], 1

</llo_original>
